<compile_context>
chip_gen: v5e
topology: v5e:2x2
jax: 0.10.0
libtpu: 0.0.40
codegen_flags: <defaults>
</compile_context>

<pallas_src>
import functools

import numpy as np
import jax
import jax.numpy as jnp
from jax.experimental import pallas as pl
from jax.experimental.pallas import tpu as pltpu


def _round_up(a, b):
    return ((a + b - 1) // b) * b


# ---------------------------------------------------------------------------
# Kernel: Fourier basis + contraction for one (tm, tn) output tile.
# ---------------------------------------------------------------------------
def _fourier_forward_kernel(x_ref, freq_ref, w0_ref, ws_ref, wc_ref, o_ref,
                            *, mxu_dtype):
    x = x_ref[...]                           # (tm, 1) f32
    t = x * freq_ref[...]                    # (tm, N) f32
    s = jnp.sin(t)
    c = jnp.cos(t)
    if jnp.dtype(mxu_dtype) != jnp.dtype(jnp.float32):
        s = s.astype(mxu_dtype)
        c = c.astype(mxu_dtype)
    out = (w0_ref[...].astype(jnp.float32)   # (1, tn) broadcast over rows
           + jnp.dot(s, ws_ref[...], preferred_element_type=jnp.float32)
           + jnp.dot(c, wc_ref[...], preferred_element_type=jnp.float32))
    o_ref[...] = out.astype(o_ref.dtype)


# ---------------------------------------------------------------------------
# One-time operand preparation (per weight set), per review feedback.
# ---------------------------------------------------------------------------
def make_fourier_params(freqvec, w, *, tn_max=512, mxu_dtype=jnp.float32):
    N = int(freqvec.shape[0])
    dim, D = int(w.shape[0]), int(w.shape[1])
    assert dim == 1 + 2 * N, "w must have 1 + 2N rows"

    # Lane (output-D) tiling decision.
    if D <= 128:
        # Small D: skip lane padding; masked stores beat 128/D x write bytes.
        d_pad, tn = D, D
    else:
        d_pad0 = _round_up(D, 128)
        n_n = pl.cdiv(d_pad0, tn_max)
        tn = _round_up(pl.cdiv(d_pad0, n_n), 128)
        d_pad = _round_up(d_pad0, tn)

    w = w.astype(jnp.float32)
    freq = freqvec.reshape(1, N).astype(jnp.float32)
    w0 = w[0:1, :]              # constant-basis bias  (1, D)
    ws = w[1:1 + N, :]          # sin weights          (N, D)
    wc = w[1 + N:, :]           # cos weights          (N, D)
    if d_pad != D:
        pad = ((0, 0), (0, d_pad - D))
        w0 = jnp.pad(w0, pad)
        ws = jnp.pad(ws, pad)
        wc = jnp.pad(wc, pad)
    ws = ws.astype(mxu_dtype)
    wc = wc.astype(mxu_dtype)
    return dict(freq=freq, w0=w0, ws=ws, wc=wc,
                N=N, D=D, d_pad=d_pad, tn=tn, mxu_dtype=mxu_dtype)


# ---------------------------------------------------------------------------
# Forward pass using prepared params.
# ---------------------------------------------------------------------------
def fourier_forward_prepared(x, params, *, tm_max=1024, interpret=False):
    assert x.ndim == 2 and x.shape[1] == 1, "x should be 2D-Tensor with 1 column"
    M = int(x.shape[0])
    N, D = params["N"], params["D"]
    d_pad, tn = params["d_pad"], params["tn"]
    mxu_dtype = params["mxu_dtype"]

    # Row tiling: balanced tiles (tail padding <= 7 rows) and >= 2 grid steps
    # when possible so the grid can be sharded across both v7x TensorCores.
    m_align = _round_up(max(M, 1), 8)
    n_m_min = 2 if m_align >= 16 else 1
    n_m = max(pl.cdiv(m_align, tm_max), n_m_min)
    tm = _round_up(pl.cdiv(m_align, n_m), 8)
    n_m = pl.cdiv(m_align, tm)
    m_pad = tm * n_m
    n_n = d_pad // tn

    x = x.astype(jnp.float32)
    x_p = x if m_pad == M else jnp.pad(x, ((0, m_pad - M), (0, 0)))

    # Single-buffer the grid-constant operands only when they are big enough
    # for the VMEM saving to matter; tiny constants keep the default pipeline.
    wsc_elt = jnp.dtype(mxu_dtype).itemsize
    const_bytes = 4 * (N + tn) + 2 * N * tn * wsc_elt
    const_mode = pl.Buffered(1) if const_bytes > (2 << 20) else None
    const_bufs = 1 if const_mode is not None else 2

    # Explicit VMEM footprint check (x + output double-buffered + constants).
    vmem_bytes = 2 * tm * 4 + 2 * tm * tn * 4 + const_bufs * const_bytes
    assert vmem_bytes < 56 * 2**20, (
        f"estimated VMEM footprint {vmem_bytes / 2**20:.1f} MiB too large; "
        "reduce tm_max/tn_max or add a K grid axis")
    vmem_limit = int(vmem_bytes * 1.5) if vmem_bytes > 24 * 2**20 else None

    cost = pl.CostEstimate(
        flops=2 * m_pad * (2 * N) * d_pad + m_pad * d_pad,
        transcendentals=2 * m_pad * N,
        bytes_accessed=(4 * (m_pad + N + d_pad)            # x, freq, w0
                        + 2 * wsc_elt * N * d_pad          # ws, wc
                        + 4 * m_pad * d_pad),              # output
    )

    kernel = functools.partial(_fourier_forward_kernel, mxu_dtype=mxu_dtype)

    out = pl.pallas_call(
        kernel,
        out_shape=jax.ShapeDtypeStruct((m_pad, d_pad), jnp.float32),
        grid_spec=pltpu.PrefetchScalarGridSpec(
            num_scalar_prefetch=0,
            grid=(n_m, n_n),
            in_specs=[
                pl.BlockSpec((tm, 1), lambda i, j: (i, 0)),               # x rows
                pl.BlockSpec((1, N), lambda i, j: (0, 0),
                             pipeline_mode=const_mode),                   # freqvec
                pl.BlockSpec((1, tn), lambda i, j: (0, j),
                             pipeline_mode=const_mode),                   # w0
                pl.BlockSpec((N, tn), lambda i, j: (0, j),
                             pipeline_mode=const_mode),                   # w_sin
                pl.BlockSpec((N, tn), lambda i, j: (0, j),
                             pipeline_mode=const_mode),                   # w_cos
            ],
            out_specs=pl.BlockSpec((tm, tn), lambda i, j: (i, j)),
        ),
        compiler_params=pltpu.CompilerParams(
            dimension_semantics=("parallel", "parallel"),
            vmem_limit_bytes=vmem_limit),
        cost_estimate=cost,
        interpret=interpret,
    )(x_p, params["freq"], params["w0"], params["ws"], params["wc"])

    if m_pad != M or d_pad != D:
        out = out[:M, :D]
    return out


def fourier_forward(x, freqvec, w, **kwargs):
    """Functional convenience wrapper (prepares weights on every call)."""
    return fourier_forward_prepared(x, make_fourier_params(freqvec, w), **kwargs)


# ---------------------------------------------------------------------------
# Plain-JAX glue mirroring FourierApprox.__init__ / find_weights / forward.
# ---------------------------------------------------------------------------
def _eval_basis_ref(x, freqvec):
    T = x * freqvec[None, :]
    return jnp.concatenate([jnp.ones_like(x), jnp.sin(T), jnp.cos(T)], axis=1)


class FourierApprox:
    """Mirrors the PyTorch module; weights/operands prepared once at init."""

    def __init__(self, Xtr, y, N, *, mxu_dtype=jnp.float32):
        self.N = N
        self.dim = 1 + 2 * N
        self.freqvec = jnp.arange(1, N + 1, dtype=jnp.float32) * 2.0 * jnp.pi
        self.find_weights(Xtr, y)
        self._params = make_fourier_params(self.freqvec, self.w,
                                           mxu_dtype=mxu_dtype)

    def find_weights(self, Xtr, y):
        B = _eval_basis_ref(Xtr.astype(jnp.float32), self.freqvec)
        lhs = B.T @ B
        rhs = B.T @ y.astype(jnp.float32)
        self.w = jnp.linalg.solve(lhs, rhs)          # (1 + 2N, D)

    def forward(self, x):
        return fourier_forward_prepared(x, self._params)

    __call__ = forward


if __name__ == "__main__":
    key = jax.random.PRNGKey(0)
    k1, k2, k3 = jax.random.split(key, 3)

    N = 4          # Fourier modes -> dim = 1 + 2N = 9
    D = 3          # output curve dimension
    M_tr = 32      # training samples (weight solve)
    M = 50         # evaluation samples (not a multiple of 8 -> exercises padding)

    Xtr = jnp.sort(jax.random.uniform(k1, (M_tr, 1), dtype=jnp.float32), axis=0)
    y = jax.random.normal(k2, (M_tr, D), dtype=jnp.float32)

    model = FourierApprox(Xtr, y, N)

    x = jax.random.uniform(k3, (M, 1), dtype=jnp.float32)
    out = jax.block_until_ready(model.forward(x))

    # Reference check against plain JAX forward (B @ w).
    ref = _eval_basis_ref(x, model.freqvec) @ model.w
    np.testing.assert_allclose(np.asarray(out), np.asarray(ref),
                               rtol=1e-4, atol=1e-4)
    print("KERNEL_OK")
</pallas_src>

<mosaic_0001>
module attributes {stable_mosaic.version = 11 : i64} {
  func.func @_fourier_forward_kernel(%arg0: i32, %arg1: i32, %arg2: memref<32x1xf32, #tpu.memory_space<vmem>>, %arg3: memref<1x4xf32, #tpu.memory_space<vmem>>, %arg4: memref<1x3xf32, #tpu.memory_space<vmem>>, %arg5: memref<4x3xf32, #tpu.memory_space<vmem>>, %arg6: memref<4x3xf32, #tpu.memory_space<vmem>>, %arg7: memref<32x3xf32, #tpu.memory_space<vmem>>) attributes {dimension_semantics = [#tpu.dimension_semantics<parallel>, #tpu.dimension_semantics<parallel>], iteration_bounds = array<i64: 2, 1>, scalar_prefetch = 0 : i64, scratch_operands = 0 : i64, tpu.core_type = #tpu.core_type<tc>, window_params = [{transform_indices = @transform_0, window_bounds = array<i64: 32, 1>}, {pipeline_mode = #tpu.pipeline_mode<synchronous>, transform_indices = @transform_1, window_bounds = array<i64: 1, 4>}, {transform_indices = @transform_2, window_bounds = array<i64: 1, 3>}, {transform_indices = @transform_3, window_bounds = array<i64: 4, 3>}, {transform_indices = @transform_4, window_bounds = array<i64: 4, 3>}, {transform_indices = @transform_5, window_bounds = array<i64: 32, 3>}]} {
    %c0 = arith.constant 0 : index
    %c0_0 = arith.constant 0 : index
    %0 = vector.load %arg2[%c0, %c0_0] : memref<32x1xf32, #tpu.memory_space<vmem>>, vector<32x1xf32>
    %c0_1 = arith.constant 0 : index
    %c0_2 = arith.constant 0 : index
    %1 = vector.load %arg3[%c0_1, %c0_2] : memref<1x4xf32, #tpu.memory_space<vmem>>, vector<1x4xf32>
    %2 = vector.broadcast %0 : vector<32x1xf32> to vector<32x4xf32>
    %3 = vector.broadcast %1 : vector<1x4xf32> to vector<32x4xf32>
    %4 = arith.mulf %2, %3 : vector<32x4xf32>
    %5 = math.sin %4 : vector<32x4xf32>
    %6 = math.cos %4 : vector<32x4xf32>
    %c0_3 = arith.constant 0 : index
    %c0_4 = arith.constant 0 : index
    %7 = vector.load %arg4[%c0_3, %c0_4] : memref<1x3xf32, #tpu.memory_space<vmem>>, vector<1x3xf32>
    %c0_5 = arith.constant 0 : index
    %c0_6 = arith.constant 0 : index
    %8 = vector.load %arg5[%c0_5, %c0_6] : memref<4x3xf32, #tpu.memory_space<vmem>>, vector<4x3xf32>
    %cst = arith.constant dense<0.000000e+00> : vector<32x3xf32>
    %9 = tpu.matmul %5, %8, %cst {dimension_numbers = #tpu.dot_dimension_numbers<[1], [0], [0], [1], [0, 0, 1, 1], [], []>} : vector<32x4xf32>, vector<4x3xf32>, vector<32x3xf32> -> vector<32x3xf32>
    %10 = vector.broadcast %7 : vector<1x3xf32> to vector<32x3xf32>
    %11 = arith.addf %10, %9 : vector<32x3xf32>
    %c0_7 = arith.constant 0 : index
    %c0_8 = arith.constant 0 : index
    %12 = vector.load %arg6[%c0_7, %c0_8] : memref<4x3xf32, #tpu.memory_space<vmem>>, vector<4x3xf32>
    %cst_9 = arith.constant dense<0.000000e+00> : vector<32x3xf32>
    %13 = tpu.matmul %6, %12, %cst_9 {dimension_numbers = #tpu.dot_dimension_numbers<[1], [0], [0], [1], [0, 0, 1, 1], [], []>} : vector<32x4xf32>, vector<4x3xf32>, vector<32x3xf32> -> vector<32x3xf32>
    %14 = arith.addf %11, %13 : vector<32x3xf32>
    %c0_10 = arith.constant 0 : index
    %c0_11 = arith.constant 0 : index
    %15 = vector.load %arg7[%c0_10, %c0_11] : memref<32x3xf32, #tpu.memory_space<vmem>>, vector<32x3xf32>
    tpu.vector_store %arg7[%c0_10, %c0_11], %14 {strides = array<i32>} : memref<32x3xf32, #tpu.memory_space<vmem>>, vector<32x3xf32>,
    return
  }
  func.func @transform_0(%arg0: i32, %arg1: i32) -> (i32, i32) {
    %c0_i32 = arith.constant 0 : i32
    %c0_i32_0 = arith.constant 0 : i32
    return %arg0, %c0_i32 : i32, i32
  }
  func.func @transform_1(%arg0: i32, %arg1: i32) -> (i32, i32) {
    %c0_i32 = arith.constant 0 : i32
    %c0_i32_0 = arith.constant 0 : i32
    %c0_i32_1 = arith.constant 0 : i32
    return %c0_i32, %c0_i32_0 : i32, i32
  }
  func.func @transform_2(%arg0: i32, %arg1: i32) -> (i32, i32) {
    %c0_i32 = arith.constant 0 : i32
    %c0_i32_0 = arith.constant 0 : i32
    return %c0_i32, %arg1 : i32, i32
  }
  func.func @transform_3(%arg0: i32, %arg1: i32) -> (i32, i32) {
    %c0_i32 = arith.constant 0 : i32
    %c0_i32_0 = arith.constant 0 : i32
    return %c0_i32, %arg1 : i32, i32
  }
  func.func @transform_4(%arg0: i32, %arg1: i32) -> (i32, i32) {
    %c0_i32 = arith.constant 0 : i32
    %c0_i32_0 = arith.constant 0 : i32
    return %c0_i32, %arg1 : i32, i32
  }
  func.func @transform_5(%arg0: i32, %arg1: i32) -> (i32, i32) {
    %c0_i32 = arith.constant 0 : i32
    return %arg0, %arg1 : i32, i32
  }
}

</mosaic_0001>

<llo_original>
// kernel: tpu_custom_call.1
$region0: #{tpu_custom_call.1}
  #allocation0 [shape = 'u32[]', space=smem, size = 0x4, offset = 0x4, fixed_abs, tag = 'smem constant byte address 0x4 - core index']
  #allocation1 [shape = 'u32[72,128]{1,0:T(1,128)}', space=vmem, size = 0x9000, scoped, tag = 'internal scratch']
  %s0 = inlined_call_operand.vmem [shape: f32[64,1], index: 0, kind: input, shape index: {}]
  %s1 = inlined_call_operand.vmem [shape: f32[1,4], index: 1, kind: input, shape index: {}]
  %s2 = inlined_call_operand.vmem [shape: f32[1,3], index: 2, kind: input, shape index: {}]
  %s3 = inlined_call_operand.vmem [shape: f32[4,3], index: 3, kind: input, shape index: {}]
  %s4 = inlined_call_operand.vmem [shape: f32[4,3], index: 4, kind: input, shape index: {}]
  %s5 = inlined_call_operand.vmem [shape: f32[64,3], index: 5, kind: output, shape index: {}]
  %s6 = sld [smem:[#allocation0]]
  $region53: #{tpu_custom_call.1} parent=0
    _
  %s8 = ssub.s32 1, %s6
  %s9 = scalar_select 0, %s8, %s6
  loop: start=0, step=1, limit=4
  $region2: #{tpu_custom_call.1} parent=0 // loop_pre_header
    _
  $region3: #{tpu_custom_call.1} parent=0 // loop_header
    %s11 = sphi 0, %s15
    %p12 = scmp.ge.s32.totalorder %s11, 4
    %s18 = sphi 0, %s30
    %s19 = sphi 0, %s26
    %s20 = sphi 0, %s18
    %s21 = sphi 0, %s19
    %s22 = sphi 0, %s20
    %s23 = sphi 0, %s21
    %s33 = sphi 0, %s35
    %s36 = sphi 0, %s33
    %s37 = sphi 0, %s36
    %s53 = sphi 0, %s37
    %s57 = sphi 0, %s57
    %s59 = sphi 0, %s57
    %s60 = sphi 0, %s59
    %s74 = sphi 0, %s60
    %s80 = sphi 0, %s82
    %s83 = sphi 0, %s80
    %s84 = sphi 0, %s83
    %s100 = sphi 0, %s84
    %s106 = sphi 0, %s108
    %s109 = sphi 0, %s106
    %s110 = sphi 0, %s109
    %s126 = sphi 0, %s110
    %s132 = sphi 0, %s134
    %s135 = sphi 0, %s132
    %s136 = sphi 0, %s135
    %s152 = sphi 0, %s136
    %s160 = sphi 0, %s162
    %s163 = sphi 0, %s160
    %s164 = sphi 0, %s163
    %s180 = sphi 0, %s164
  $region4: #{tpu_custom_call.1} parent=0 // loop_header_branch
    %14 = sbr.rel (%p12) target = $region8
  $region5: #{tpu_custom_call.1} parent=0 // loop_body
    %s16 = ssub.s32 %s11, 1
    %s17 = ssub.s32 %s11, 2
    %s24 = sadd.s32 1, %s19
    %p25 = scmp.ge.s32.totalorder %s24, 1
    %s26 = scalar_select %p25, 0, %s24
    %s27 = sadd.s32 1, %s18
    %s28 = scalar_select %p25, %s27, %s18
    %p29 = scmp.ge.s32.totalorder %s28, 2
    %s30 = scalar_select %p29, 0, %s28
    %s31 = ssub.s32 %s18, %s30
    %p32 = scmp.eq.s32.totalorder %s31, 0
    %s34 = sadd.s32 %s33, 1
    %s35 = scalar_select %p32, %s33, %s34
    %p38 = pneg %p32
    %p39 = scmp.eq.s32.totalorder %s11, 1
    %p40 = por %p38, %p39
    %p41 = scmp.ne.s32.totalorder %s33, %s36
    %p42 = scmp.eq.s32.totalorder %s11, 0
    %p43 = por %p41, %p42
    %p44 = scmp.ne.s32.totalorder %s33, %s36
    %p45 = scmp.eq.s32.totalorder %s16, 1
    %p46 = por %p44, %p45
    %p47 = scmp.ne.s32.totalorder %s36, %s37
    %p48 = scmp.eq.s32.totalorder %s16, 0
    %p49 = por %p47, %p48
    %p50 = scmp.ne.s32.totalorder %s36, %s37
    %p51 = scmp.eq.s32.totalorder %s17, 1
    %p52 = por %p50, %p51
    %p54 = scmp.ne.s32.totalorder %s37, %s53
    %p55 = scmp.eq.s32.totalorder %s17, 0
    %p56 = por %p54, %p55
    %s58 = sadd.s32 %s57, 1
    %p61 = scmp.eq.s32.totalorder %s11, 1
    %p62 = scmp.ne.s32.totalorder %s57, %s59
    %p63 = scmp.eq.s32.totalorder %s11, 0
    %p64 = por %p62, %p63
    %p65 = scmp.ne.s32.totalorder %s57, %s59
    %p66 = scmp.eq.s32.totalorder %s16, 1
    %p67 = por %p65, %p66
    %p68 = scmp.ne.s32.totalorder %s59, %s60
    %p69 = scmp.eq.s32.totalorder %s16, 0
    %p70 = por %p68, %p69
    %p71 = scmp.ne.s32.totalorder %s59, %s60
    %p72 = scmp.eq.s32.totalorder %s17, 1
    %p73 = por %p71, %p72
    %p75 = scmp.ne.s32.totalorder %s60, %s74
    %p76 = scmp.eq.s32.totalorder %s17, 0
    %p77 = por %p75, %p76
    %s78 = ssub.s32 %s19, %s26
    %p79 = scmp.eq.s32.totalorder %s78, 0
    %s81 = sadd.s32 %s80, 1
    %s82 = scalar_select %p79, %s80, %s81
    %p85 = pneg %p79
    %p86 = scmp.eq.s32.totalorder %s11, 1
    %p87 = por %p85, %p86
    %p88 = scmp.ne.s32.totalorder %s80, %s83
    %p89 = scmp.eq.s32.totalorder %s11, 0
    %p90 = por %p88, %p89
    %p91 = scmp.ne.s32.totalorder %s80, %s83
    %p92 = scmp.eq.s32.totalorder %s16, 1
    %p93 = por %p91, %p92
    %p94 = scmp.ne.s32.totalorder %s83, %s84
    %p95 = scmp.eq.s32.totalorder %s16, 0
    %p96 = por %p94, %p95
    %p97 = scmp.ne.s32.totalorder %s83, %s84
    %p98 = scmp.eq.s32.totalorder %s17, 1
    %p99 = por %p97, %p98
    %p101 = scmp.ne.s32.totalorder %s84, %s100
    %p102 = scmp.eq.s32.totalorder %s17, 0
    %p103 = por %p101, %p102
    %s104 = ssub.s32 %s19, %s26
    %p105 = scmp.eq.s32.totalorder %s104, 0
    %s107 = sadd.s32 %s106, 1
    %s108 = scalar_select %p105, %s106, %s107
    %p111 = pneg %p105
    %p112 = scmp.eq.s32.totalorder %s11, 1
    %p113 = por %p111, %p112
    %p114 = scmp.ne.s32.totalorder %s106, %s109
    %p115 = scmp.eq.s32.totalorder %s11, 0
    %p116 = por %p114, %p115
    %p117 = scmp.ne.s32.totalorder %s106, %s109
    %p118 = scmp.eq.s32.totalorder %s16, 1
    %p119 = por %p117, %p118
    %p120 = scmp.ne.s32.totalorder %s109, %s110
    %p121 = scmp.eq.s32.totalorder %s16, 0
    %p122 = por %p120, %p121
    %p123 = scmp.ne.s32.totalorder %s109, %s110
    %p124 = scmp.eq.s32.totalorder %s17, 1
    %p125 = por %p123, %p124
    %p127 = scmp.ne.s32.totalorder %s110, %s126
    %p128 = scmp.eq.s32.totalorder %s17, 0
    %p129 = por %p127, %p128
    %s130 = ssub.s32 %s19, %s26
    %p131 = scmp.eq.s32.totalorder %s130, 0
    %s133 = sadd.s32 %s132, 1
    %s134 = scalar_select %p131, %s132, %s133
    %p137 = pneg %p131
    %p138 = scmp.eq.s32.totalorder %s11, 1
    %p139 = por %p137, %p138
    %p140 = scmp.ne.s32.totalorder %s132, %s135
    %p141 = scmp.eq.s32.totalorder %s11, 0
    %p142 = por %p140, %p141
    %p143 = scmp.ne.s32.totalorder %s132, %s135
    %p144 = scmp.eq.s32.totalorder %s16, 1
    %p145 = por %p143, %p144
    %p146 = scmp.ne.s32.totalorder %s135, %s136
    %p147 = scmp.eq.s32.totalorder %s16, 0
    %p148 = por %p146, %p147
    %p149 = scmp.ne.s32.totalorder %s135, %s136
    %p150 = scmp.eq.s32.totalorder %s17, 1
    %p151 = por %p149, %p150
    %p153 = scmp.ne.s32.totalorder %s136, %s152
    %p154 = scmp.eq.s32.totalorder %s17, 0
    %p155 = por %p153, %p154
    %s156 = ssub.s32 %s18, %s30
    %s157 = ssub.s32 %s19, %s26
    %s158 = sor.u32 %s156, %s157
    %p159 = scmp.eq.s32.totalorder %s158, 0
    %s161 = sadd.s32 %s160, 1
    %s162 = scalar_select %p159, %s160, %s161
    %p165 = pneg %p159
    %p166 = scmp.eq.s32.totalorder %s11, 1
    %p167 = por %p165, %p166
    %p168 = scmp.ne.s32.totalorder %s160, %s163
    %p169 = scmp.eq.s32.totalorder %s11, 0
    %p170 = por %p168, %p169
    %p171 = scmp.ne.s32.totalorder %s160, %s163
    %p172 = scmp.eq.s32.totalorder %s16, 1
    %p173 = por %p171, %p172
    %p174 = scmp.ne.s32.totalorder %s163, %s164
    %p175 = scmp.eq.s32.totalorder %s16, 0
    %p176 = por %p174, %p175
    %p177 = scmp.ne.s32.totalorder %s163, %s164
    %p178 = scmp.eq.s32.totalorder %s17, 1
    %p179 = por %p177, %p178
    %p181 = scmp.ne.s32.totalorder %s164, %s180
    %p182 = scmp.eq.s32.totalorder %s17, 0
    %p183 = por %p181, %p182
    %p184 = scmp.le.s32.totalorder 1, %s11
    %p185 = scmp.lt.s32.totalorder %s11, 3
    %p186 = pnand %p184, %p185
    %p187 = pneg %p186
    // Predicated region
    $region9: #{tpu_custom_call.1} parent=5 // pred_check
      _
    $region10: #{tpu_custom_call.1} parent=5 // pred_check_branch
      %189 = sbr.rel (%p186) target = $region12
    $region11: #{tpu_custom_call.1} parent=5 // pred_region
      %s190 = ssub.s32 %s11, 1
      // Predicated region
      $region13: #{tpu_custom_call.1} parent=11 // pred_check
        %p191 = pneg %p70
      $region14: #{tpu_custom_call.1} parent=11 // pred_check_branch
        %193 = sbr.rel (%p191) target = $region16
      $region15: #{tpu_custom_call.1} parent=11 // pred_region
        _
      $region16: #{tpu_custom_call.1} parent=11 // pred_fallthru
        _
      // Predicated region
      $region17: #{tpu_custom_call.1} parent=11 // pred_check
        %p194 = pneg %p96
      $region18: #{tpu_custom_call.1} parent=11 // pred_check_branch
        %196 = sbr.rel (%p194) target = $region20
      $region19: #{tpu_custom_call.1} parent=11 // pred_region
        %p197 = scmp.lt.s32.totalorder %s21, 0
        %s198 = scalar_select %p197, %s21, 0
        %s199 = scalar_lea.vmem %s2, %s198
      $region20: #{tpu_custom_call.1} parent=11 // pred_fallthru
        _
      // Predicated region
      $region21: #{tpu_custom_call.1} parent=11 // pred_check
        %p200 = pneg %p122
      $region22: #{tpu_custom_call.1} parent=11 // pred_check_branch
        %202 = sbr.rel (%p200) target = $region24
      $region23: #{tpu_custom_call.1} parent=11 // pred_region
        %p203 = scmp.lt.s32.totalorder %s21, 0
        %s204 = scalar_select %p203, %s21, 0
        %s205 = smul.addr %s204, 4
        %s206 = scalar_lea.vmem %s3, %s205
      $region24: #{tpu_custom_call.1} parent=11 // pred_fallthru
        _
      // Predicated region
      $region25: #{tpu_custom_call.1} parent=11 // pred_check
        %p207 = pneg %p148
      $region26: #{tpu_custom_call.1} parent=11 // pred_check_branch
        %209 = sbr.rel (%p207) target = $region28
      $region27: #{tpu_custom_call.1} parent=11 // pred_region
        %p210 = scmp.lt.s32.totalorder %s21, 0
        %s211 = scalar_select %p210, %s21, 0
        %s212 = smul.addr %s211, 4
        %s213 = scalar_lea.vmem %s4, %s212
      $region28: #{tpu_custom_call.1} parent=11 // pred_fallthru
        _
    $region12: #{tpu_custom_call.1} parent=5 // pred_fallthru
      _
    %p214 = scmp.lt.s32.totalorder %s11, 2
    // Predicated region
    $region29: #{tpu_custom_call.1} parent=5 // pred_check
      %p215 = pneg %p214
    $region30: #{tpu_custom_call.1} parent=5 // pred_check_branch
      %217 = sbr.rel (%p215) target = $region32
    $region31: #{tpu_custom_call.1} parent=5 // pred_region
      // Predicated region
      $region33: #{tpu_custom_call.1} parent=31 // pred_check
        %p218 = pneg %p43
      $region34: #{tpu_custom_call.1} parent=31 // pred_check_branch
        %220 = sbr.rel (%p218) target = $region36
      $region35: #{tpu_custom_call.1} parent=31 // pred_region
        %s221 = smul.u32 4, %s18
        %p222 = scmp.lt.s32.totalorder %s221, 7
        %s223 = scalar_select %p222, %s221, 7
        %s224 = smul.addr %s223, 8
        %s225 = scalar_lea.vmem %s0, %s224
        %s226 = smul.u32 4, %s18
      $region36: #{tpu_custom_call.1} parent=31 // pred_fallthru
        _
    $region32: #{tpu_custom_call.1} parent=5 // pred_fallthru
      _
    %p227 = scmp.le.s32.totalorder 1, %s11
    %p228 = scmp.lt.s32.totalorder %s11, 3
    %p229 = pnand %p227, %p228
    %p230 = pneg %p229
    // Predicated region
    $region37: #{tpu_custom_call.1} parent=5 // pred_check
      _
    $region38: #{tpu_custom_call.1} parent=5 // pred_check_branch
      %232 = sbr.rel (%p229) target = $region40
    $region39: #{tpu_custom_call.1} parent=5 // pred_region
      %s233 = ssub.s32 %s11, 1
      %s234 = smul.u32 4, %s20
      %p235 = scmp.lt.s32.totalorder %s234, 7
      %s236 = scalar_select %p235, %s234, 7
      %s237 = smul.addr %s236, 8
      %s238 = scalar_lea.vmem %s0, %s237
      %p239 = pneg %p49
      %p240 = pneg %p46
      %p241 = pneg %p70
      %p242 = pneg %p67
      %p243 = scmp.lt.s32.totalorder %s21, 0
      %s244 = scalar_select %p243, %s21, 0
      %s245 = scalar_lea.vmem %s2, %s244
      %p246 = pneg %p96
      %p247 = pneg %p93
      %p248 = scmp.lt.s32.totalorder %s21, 0
      %s249 = scalar_select %p248, %s21, 0
      %s250 = smul.addr %s249, 4
      %s251 = scalar_lea.vmem %s3, %s250
      %p252 = pneg %p122
      %p253 = pneg %p119
      %p254 = scmp.lt.s32.totalorder %s21, 0
      %s255 = scalar_select %p254, %s21, 0
      %s256 = smul.addr %s255, 4
      %s257 = scalar_lea.vmem %s4, %s256
      %p258 = pneg %p148
      %p259 = pneg %p145
      %p260 = pneg %p176
      %p261 = pneg %p173
      %s262 = smul.u32 4, %s20
      %p263 = scmp.lt.s32.totalorder %s262, 7
      %s264 = scalar_select %p263, %s262, 7
      %p265 = scmp.lt.s32.totalorder %s21, 0
      %s266 = scalar_select %p265, %s21, 0
      %s267 = sadd.s32 %s266, %s264
      %s268 = smul.addr %s267, 8
      %s269 = scalar_lea.vmem %s5, %s268
      %s270 = smul.u32 4, %s20
      %p271 = scmp.lt.s32.totalorder %s270, 7
      %s272 = scalar_select %p271, %s270, 7
      %s273 = smul.addr %s272, 8
      %s274 = scalar_lea.vmem %s0, %s273
      %s275 = smul.u32 4, %s20
      %p276 = scmp.lt.s32.totalorder %s21, 0
      %s277 = scalar_select %p276, %s21, 0
      %s278 = scalar_lea.vmem %s2, %s277
      %p279 = scmp.lt.s32.totalorder %s21, 0
      %s280 = scalar_select %p279, %s21, 0
      %s281 = smul.addr %s280, 4
      %s282 = scalar_lea.vmem %s3, %s281
      %p283 = scmp.lt.s32.totalorder %s21, 0
      %s284 = scalar_select %p283, %s21, 0
      %s285 = smul.addr %s284, 4
      %s286 = scalar_lea.vmem %s4, %s285
      %s287 = smul.u32 4, %s20
      %p288 = scmp.lt.s32.totalorder %s287, 7
      %s289 = scalar_select %p288, %s287, 7
      %p290 = scmp.lt.s32.totalorder %s21, 0
      %s291 = scalar_select %p290, %s21, 0
      %s292 = sadd.s32 %s291, %s289
      %s293 = smul.addr %s292, 8
      %s294 = scalar_lea.vmem %s5, %s293
      %s295 = smul.u32 4, %s20
      %v296 = vld [vmem:[%s274] sm:$0xff]
      %v297 = vld [vmem:[%s274 + $0x8] sm:$0xff]
      %v298 = vld [vmem:[%s274 + $0x10] sm:$0xff]
      %v299 = vld [vmem:[%s274 + $0x18] sm:$0xff]
      %v300 = vld [vmem:[%s1] sm:$0x1]
      %302 = vset.pattern.permute.xlu0 0
      %303 = vperm.xlu0 %302, %v296
      %v304 = vpop.permute.xlu0 %303
      %307 = vset.pattern.permute.xlu0 0
      %308 = vperm.xlu0 %307, %v297
      %v309 = vpop.permute.xlu0 %308
      %312 = vset.pattern.permute.xlu0 0
      %313 = vperm.xlu0 %312, %v298
      %v314 = vpop.permute.xlu0 %313
      %317 = vset.pattern.permute.xlu0 0
      %318 = vperm.xlu0 %317, %v299
      %v319 = vpop.permute.xlu0 %318
      %v322 = vperm.slane %v300, 0
      %v324 = vmul.f32 %v304, %v322
      %v325 = vmul.f32 %v309, %v322
      %v326 = vmul.f32 %v314, %v322
      %v327 = vmul.f32 %v319, %v322
      %v328 = vand.u32 2147483647, %v324
      %vm329 = vcmp.le.f32.partialorder %v328, 0.7853982
      %vm330 = vcmp.lt.s32.totalorder %v324, 0
      %v331 = vand.u32 %v324, 2139095040
      %v332 = vshrl.u32 %v331, 23
      %v333 = vsub.s32 %v332, 127
      %v334 = vand.u32 2147483647, %v324
      %v335 = vand.u32 %v334, 8388607
      %v336 = vor.u32 %v335, 8388608
      %v337 = vsub.s32 0, %v336
      %v338 = vadd.s32 %v333, 1
      %vm339 = vcmp.gt.s32.totalorder %v338, 0
      %v340 = vsel %vm339, %v338, 0
      %v341 = vshrl.u32 %v340, 5
      %v342 = vand.u32 %v340, 31
      %v343 = vsub.s32 32, %v342
      %v344 = vshrl.u32 683565275, %v343
      %v345 = vshll.u32 683565275, %v342
      %v346 = vshrl.u32 2475754826, %v343
      %v347 = vor.u32 %v345, %v346
      %v348 = vshll.u32 2475754826, %v342
      %v349 = vshrl.u32 2131351028, %v343
      %v350 = vor.u32 %v348, %v349
      %v351 = vshll.u32 2131351028, %v342
      %v352 = vshrl.u32 2102212464, %v343
      %v353 = vor.u32 %v351, %v352
      %v354 = vshll.u32 2102212464, %v342
      %v355 = vshrl.u32 920167782, %v343
      %v356 = vor.u32 %v354, %v355
      %v357 = vshll.u32 920167782, %v342
      %v358 = vshrl.u32 1326507024, %v343
      %v359 = vor.u32 %v357, %v358
      %vm360 = vcmp.lt.s32.totalorder %v341, 1
      %vm361 = vcmp.lt.s32.totalorder %v341, 2
      %vm362 = vcmp.lt.s32.totalorder %v341, 3
      %vm363 = vcmp.lt.s32.totalorder %v341, 4
      %v364 = vsel %vm360, %v344, %v347
      %v365 = vsel %vm363, %v353, 2102212464
      %v366 = vsel %vm362, %v350, %v365
      %v367 = vsel %vm361, %v364, %v366
      %v368 = vsel %vm360, %v347, %v350
      %v369 = vsel %vm363, %v356, 920167782
      %v370 = vsel %vm362, %v353, %v369
      %v371 = vsel %vm361, %v368, %v370
      %v372 = vsel %vm360, %v350, %v353
      %v373 = vsel %vm363, %v359, 1326507024
      %v374 = vsel %vm362, %v356, %v373
      %v375 = vsel %vm361, %v372, %v374
      %v376 = vshll.u32 %v336, 8
      %v377 = vand.u32 %v376, 65535
      %v378 = vshrl.u32 %v376, 16
      %v379 = vand.u32 %v375, 65535
      %v380 = vshrl.u32 %v375, 16
      %v381 = vmul.u32 %v377, %v379
      %v382 = vmul.u32 %v377, %v380
      %v383 = vmul.u32 %v378, %v379
      %v384 = vmul.u32 %v378, %v380
      %v385 = vshll.u32 %v382, 16
      %v386 = vshrl.u32 %v382, 16
      %v387 = vshll.u32 %v383, 16
      %v388 = vshrl.u32 %v383, 16
      %vm389 = vc.u32 %v381, %v385
      %v390 = vsel %vm389, 1, 0
      %v391 = vadd.s32 %v381, %v385
      %v392 = vadd.s32 %v384, %v390
      %vm393 = vc.u32 %v391, %v387
      %v394 = vsel %vm393, 1, 0
      %v395 = vadd.s32 %v391, %v387
      %v396 = vadd.s32 %v392, %v394
      %v397 = vadd.s32 %v396, %v386
      %v398 = vadd.s32 %v397, %v388
      %v399 = vand.u32 %v376, 65535
      %v400 = vshrl.u32 %v376, 16
      %v401 = vand.u32 %v371, 65535
      %v402 = vshrl.u32 %v371, 16
      %v403 = vmul.u32 %v399, %v401
      %v404 = vmul.u32 %v399, %v402
      %v405 = vmul.u32 %v400, %v401
      %v406 = vmul.u32 %v400, %v402
      %v407 = vshll.u32 %v404, 16
      %v408 = vshrl.u32 %v404, 16
      %v409 = vshll.u32 %v405, 16
      %v410 = vshrl.u32 %v405, 16
      %vm411 = vc.u32 %v403, %v407
      %v412 = vsel %vm411, 1, 0
      %v413 = vadd.s32 %v403, %v407
      %v414 = vadd.s32 %v406, %v412
      %vm415 = vc.u32 %v413, %v409
      %v416 = vsel %vm415, 1, 0
      %v417 = vadd.s32 %v413, %v409
      %v418 = vadd.s32 %v414, %v416
      %v419 = vadd.s32 %v418, %v408
      %v420 = vadd.s32 %v419, %v410
      %v421 = vmul.u32 %v376, %v367
      %v422 = vadd.s32 %v398, %v417
      %vm423 = vc.u32 %v398, %v417
      %v424 = vadd.s32 %v420, 1
      %v425 = vsel %vm423, %v424, %v420
      %v426 = vadd.s32 %v421, %v425
      %v427 = vadd.s32 %v426, 536870912
      %v428 = vshrl.u32 %v427, 30
      %v429 = vshll.u32 %v428, 30
      %v430 = vsub.s32 %v426, %v429
      %vm431 = vcmp.lt.s32.totalorder %v430, 0
      %v432 = vsub.s32 0, %v430
      %v433 = vsel %vm431, %v432, %v430
      %v434 = vclz %v433
      %v435 = vsub.s32 %v434, 2
      %vm436 = vcmp.gt.s32.totalorder 0, %v435
      %v437 = vsel %vm436, 0, %v435
      %v438 = vsub.s32 32, %v437
      %v439 = vshll.u32 %v430, %v437
      %v440 = vshrl.u32 %v422, %v438
      %v441 = vor.u32 %v439, %v440
      %v442 = vsub.s32 4294967266, %v437
      %v443 = vadd.s32 %v442, 127
      %v444 = vshll.u32 %v443, 23
      %v445 = vor.u32 4788187, %v444
      %v446 = vand.u32 2147483647, %v445
      %v448 = vcvt.s32.f32 %v441
      %v449 = vmul.f32 %v448, %v446
      %v450 = vxor.u32 %v449, 2147483648
      %v451 = vsel %vm330, %v450, %v449
      %v452 = vsub.s32 4, %v428
      %v453 = vsel %vm330, %v452, %v428
      %v454 = vsel %vm329, %v324, %v451
      %v455 = vsel %vm329, 0, %v453
      %v456 = vmul.f32 %v454, %v454
      %v457 = vmul.f32 %v456, -0.001358992
      %v458 = vadd.f32 %v457, 0.041655596
      %v459 = vmul.f32 %v456, %v458
      %v460 = vadd.f32 %v459, -0.4999988
      %v461 = vmul.f32 %v456, %v460
      %v462 = vadd.f32 1.0, %v461
      %v463 = vmul.f32 %v454, %v454
      %v464 = vmul.f32 %v463, -0.00019511016
      %v465 = vadd.f32 %v464, 0.008332121
      %v466 = vmul.f32 %v463, %v465
      %v467 = vadd.f32 %v466, -0.16666654
      %v468 = vmul.f32 %v463, %v467
      %v469 = vadd.f32 %v468, 1.0
      %v470 = vmul.f32 %v469, %v454
      %vm471 = vweird.f32 %v324
      %v472 = vadd.s32 %v455, 3
      %v473 = vand.u32 %v472, 3
      %vm474 = vcmp.lt.s32.totalorder %v473, 2
      %vm475 = vcmp.eq.s32.totalorder %v473, 0
      %v476 = vxor.u32 %v470, 2147483648
      %v477 = vsel %vm475, %v462, %v476
      %vm478 = vcmp.eq.s32.totalorder %v473, 2
      %v479 = vxor.u32 %v462, 2147483648
      %v480 = vsel %vm478, %v479, %v470
      %v481 = vsel %vm474, %v477, %v480
      %v482 = vsel %vm471, nan, %v481
      %v483 = vand.u32 2147483647, %v325
      %vm484 = vcmp.le.f32.partialorder %v483, 0.7853982
      %vm485 = vcmp.lt.s32.totalorder %v325, 0
      %v486 = vand.u32 %v325, 2139095040
      %v487 = vshrl.u32 %v486, 23
      %v488 = vsub.s32 %v487, 127
      %v489 = vand.u32 2147483647, %v325
      %v490 = vand.u32 %v489, 8388607
      %v491 = vor.u32 %v490, 8388608
      %v492 = vsub.s32 0, %v491
      %v493 = vadd.s32 %v488, 1
      %vm494 = vcmp.gt.s32.totalorder %v493, 0
      %v495 = vsel %vm494, %v493, 0
      %v496 = vshrl.u32 %v495, 5
      %v497 = vand.u32 %v495, 31
      %v498 = vsub.s32 32, %v497
      %v499 = vshrl.u32 683565275, %v498
      %v500 = vshll.u32 683565275, %v497
      %v501 = vshrl.u32 2475754826, %v498
      %v502 = vor.u32 %v500, %v501
      %v503 = vshll.u32 2475754826, %v497
      %v504 = vshrl.u32 2131351028, %v498
      %v505 = vor.u32 %v503, %v504
      %v506 = vshll.u32 2131351028, %v497
      %v507 = vshrl.u32 2102212464, %v498
      %v508 = vor.u32 %v506, %v507
      %v509 = vshll.u32 2102212464, %v497
      %v510 = vshrl.u32 920167782, %v498
      %v511 = vor.u32 %v509, %v510
      %v512 = vshll.u32 920167782, %v497
      %v513 = vshrl.u32 1326507024, %v498
      %v514 = vor.u32 %v512, %v513
      %vm515 = vcmp.lt.s32.totalorder %v496, 1
      %vm516 = vcmp.lt.s32.totalorder %v496, 2
      %vm517 = vcmp.lt.s32.totalorder %v496, 3
      %vm518 = vcmp.lt.s32.totalorder %v496, 4
      %v519 = vsel %vm515, %v499, %v502
      %v520 = vsel %vm518, %v508, 2102212464
      %v521 = vsel %vm517, %v505, %v520
      %v522 = vsel %vm516, %v519, %v521
      %v523 = vsel %vm515, %v502, %v505
      %v524 = vsel %vm518, %v511, 920167782
      %v525 = vsel %vm517, %v508, %v524
      %v526 = vsel %vm516, %v523, %v525
      %v527 = vsel %vm515, %v505, %v508
      %v528 = vsel %vm518, %v514, 1326507024
      %v529 = vsel %vm517, %v511, %v528
      %v530 = vsel %vm516, %v527, %v529
      %v531 = vshll.u32 %v491, 8
      %v532 = vand.u32 %v531, 65535
      %v533 = vshrl.u32 %v531, 16
      %v534 = vand.u32 %v530, 65535
      %v535 = vshrl.u32 %v530, 16
      %v536 = vmul.u32 %v532, %v534
      %v537 = vmul.u32 %v532, %v535
      %v538 = vmul.u32 %v533, %v534
      %v539 = vmul.u32 %v533, %v535
      %v540 = vshll.u32 %v537, 16
      %v541 = vshrl.u32 %v537, 16
      %v542 = vshll.u32 %v538, 16
      %v543 = vshrl.u32 %v538, 16
      %vm544 = vc.u32 %v536, %v540
      %v545 = vsel %vm544, 1, 0
      %v546 = vadd.s32 %v536, %v540
      %v547 = vadd.s32 %v539, %v545
      %vm548 = vc.u32 %v546, %v542
      %v549 = vsel %vm548, 1, 0
      %v550 = vadd.s32 %v546, %v542
      %v551 = vadd.s32 %v547, %v549
      %v552 = vadd.s32 %v551, %v541
      %v553 = vadd.s32 %v552, %v543
      %v554 = vand.u32 %v531, 65535
      %v555 = vshrl.u32 %v531, 16
      %v556 = vand.u32 %v526, 65535
      %v557 = vshrl.u32 %v526, 16
      %v558 = vmul.u32 %v554, %v556
      %v559 = vmul.u32 %v554, %v557
      %v560 = vmul.u32 %v555, %v556
      %v561 = vmul.u32 %v555, %v557
      %v562 = vshll.u32 %v559, 16
      %v563 = vshrl.u32 %v559, 16
      %v564 = vshll.u32 %v560, 16
      %v565 = vshrl.u32 %v560, 16
      %vm566 = vc.u32 %v558, %v562
      %v567 = vsel %vm566, 1, 0
      %v568 = vadd.s32 %v558, %v562
      %v569 = vadd.s32 %v561, %v567
      %vm570 = vc.u32 %v568, %v564
      %v571 = vsel %vm570, 1, 0
      %v572 = vadd.s32 %v568, %v564
      %v573 = vadd.s32 %v569, %v571
      %v574 = vadd.s32 %v573, %v563
      %v575 = vadd.s32 %v574, %v565
      %v576 = vmul.u32 %v531, %v522
      %v577 = vadd.s32 %v553, %v572
      %vm578 = vc.u32 %v553, %v572
      %v579 = vadd.s32 %v575, 1
      %v580 = vsel %vm578, %v579, %v575
      %v581 = vadd.s32 %v576, %v580
      %v582 = vadd.s32 %v581, 536870912
      %v583 = vshrl.u32 %v582, 30
      %v584 = vshll.u32 %v583, 30
      %v585 = vsub.s32 %v581, %v584
      %vm586 = vcmp.lt.s32.totalorder %v585, 0
      %v587 = vsub.s32 0, %v585
      %v588 = vsel %vm586, %v587, %v585
      %v589 = vclz %v588
      %v590 = vsub.s32 %v589, 2
      %vm591 = vcmp.gt.s32.totalorder 0, %v590
      %v592 = vsel %vm591, 0, %v590
      %v593 = vsub.s32 32, %v592
      %v594 = vshll.u32 %v585, %v592
      %v595 = vshrl.u32 %v577, %v593
      %v596 = vor.u32 %v594, %v595
      %v597 = vsub.s32 4294967266, %v592
      %v598 = vadd.s32 %v597, 127
      %v599 = vshll.u32 %v598, 23
      %v600 = vor.u32 4788187, %v599
      %v601 = vand.u32 2147483647, %v600
      %v603 = vcvt.s32.f32 %v596
      %v604 = vmul.f32 %v603, %v601
      %v605 = vxor.u32 %v604, 2147483648
      %v606 = vsel %vm485, %v605, %v604
      %v607 = vsub.s32 4, %v583
      %v608 = vsel %vm485, %v607, %v583
      %v609 = vsel %vm484, %v325, %v606
      %v610 = vsel %vm484, 0, %v608
      %v611 = vmul.f32 %v609, %v609
      %v612 = vmul.f32 %v611, -0.001358992
      %v613 = vadd.f32 %v612, 0.041655596
      %v614 = vmul.f32 %v611, %v613
      %v615 = vadd.f32 %v614, -0.4999988
      %v616 = vmul.f32 %v611, %v615
      %v617 = vadd.f32 1.0, %v616
      %v618 = vmul.f32 %v609, %v609
      %v619 = vmul.f32 %v618, -0.00019511016
      %v620 = vadd.f32 %v619, 0.008332121
      %v621 = vmul.f32 %v618, %v620
      %v622 = vadd.f32 %v621, -0.16666654
      %v623 = vmul.f32 %v618, %v622
      %v624 = vadd.f32 %v623, 1.0
      %v625 = vmul.f32 %v624, %v609
      %vm626 = vweird.f32 %v325
      %v627 = vadd.s32 %v610, 3
      %v628 = vand.u32 %v627, 3
      %vm629 = vcmp.lt.s32.totalorder %v628, 2
      %vm630 = vcmp.eq.s32.totalorder %v628, 0
      %v631 = vxor.u32 %v625, 2147483648
      %v632 = vsel %vm630, %v617, %v631
      %vm633 = vcmp.eq.s32.totalorder %v628, 2
      %v634 = vxor.u32 %v617, 2147483648
      %v635 = vsel %vm633, %v634, %v625
      %v636 = vsel %vm629, %v632, %v635
      %v637 = vsel %vm626, nan, %v636
      %v638 = vand.u32 2147483647, %v326
      %vm639 = vcmp.le.f32.partialorder %v638, 0.7853982
      %vm640 = vcmp.lt.s32.totalorder %v326, 0
      %v641 = vand.u32 %v326, 2139095040
      %v642 = vshrl.u32 %v641, 23
      %v643 = vsub.s32 %v642, 127
      %v644 = vand.u32 2147483647, %v326
      %v645 = vand.u32 %v644, 8388607
      %v646 = vor.u32 %v645, 8388608
      %v647 = vsub.s32 0, %v646
      %v648 = vadd.s32 %v643, 1
      %vm649 = vcmp.gt.s32.totalorder %v648, 0
      %v650 = vsel %vm649, %v648, 0
      %v651 = vshrl.u32 %v650, 5
      %v652 = vand.u32 %v650, 31
      %v653 = vsub.s32 32, %v652
      %v654 = vshrl.u32 683565275, %v653
      %v655 = vshll.u32 683565275, %v652
      %v656 = vshrl.u32 2475754826, %v653
      %v657 = vor.u32 %v655, %v656
      %v658 = vshll.u32 2475754826, %v652
      %v659 = vshrl.u32 2131351028, %v653
      %v660 = vor.u32 %v658, %v659
      %v661 = vshll.u32 2131351028, %v652
      %v662 = vshrl.u32 2102212464, %v653
      %v663 = vor.u32 %v661, %v662
      %v664 = vshll.u32 2102212464, %v652
      %v665 = vshrl.u32 920167782, %v653
      %v666 = vor.u32 %v664, %v665
      %v667 = vshll.u32 920167782, %v652
      %v668 = vshrl.u32 1326507024, %v653
      %v669 = vor.u32 %v667, %v668
      %vm670 = vcmp.lt.s32.totalorder %v651, 1
      %vm671 = vcmp.lt.s32.totalorder %v651, 2
      %vm672 = vcmp.lt.s32.totalorder %v651, 3
      %vm673 = vcmp.lt.s32.totalorder %v651, 4
      %v674 = vsel %vm670, %v654, %v657
      %v675 = vsel %vm673, %v663, 2102212464
      %v676 = vsel %vm672, %v660, %v675
      %v677 = vsel %vm671, %v674, %v676
      %v678 = vsel %vm670, %v657, %v660
      %v679 = vsel %vm673, %v666, 920167782
      %v680 = vsel %vm672, %v663, %v679
      %v681 = vsel %vm671, %v678, %v680
      %v682 = vsel %vm670, %v660, %v663
      %v683 = vsel %vm673, %v669, 1326507024
      %v684 = vsel %vm672, %v666, %v683
      %v685 = vsel %vm671, %v682, %v684
      %v686 = vshll.u32 %v646, 8
      %v687 = vand.u32 %v686, 65535
      %v688 = vshrl.u32 %v686, 16
      %v689 = vand.u32 %v685, 65535
      %v690 = vshrl.u32 %v685, 16
      %v691 = vmul.u32 %v687, %v689
      %v692 = vmul.u32 %v687, %v690
      %v693 = vmul.u32 %v688, %v689
      %v694 = vmul.u32 %v688, %v690
      %v695 = vshll.u32 %v692, 16
      %v696 = vshrl.u32 %v692, 16
      %v697 = vshll.u32 %v693, 16
      %v698 = vshrl.u32 %v693, 16
      %vm699 = vc.u32 %v691, %v695
      %v700 = vsel %vm699, 1, 0
      %v701 = vadd.s32 %v691, %v695
      %v702 = vadd.s32 %v694, %v700
      %vm703 = vc.u32 %v701, %v697
      %v704 = vsel %vm703, 1, 0
      %v705 = vadd.s32 %v701, %v697
      %v706 = vadd.s32 %v702, %v704
      %v707 = vadd.s32 %v706, %v696
      %v708 = vadd.s32 %v707, %v698
      %v709 = vand.u32 %v686, 65535
      %v710 = vshrl.u32 %v686, 16
      %v711 = vand.u32 %v681, 65535
      %v712 = vshrl.u32 %v681, 16
      %v713 = vmul.u32 %v709, %v711
      %v714 = vmul.u32 %v709, %v712
      %v715 = vmul.u32 %v710, %v711
      %v716 = vmul.u32 %v710, %v712
      %v717 = vshll.u32 %v714, 16
      %v718 = vshrl.u32 %v714, 16
      %v719 = vshll.u32 %v715, 16
      %v720 = vshrl.u32 %v715, 16
      %vm721 = vc.u32 %v713, %v717
      %v722 = vsel %vm721, 1, 0
      %v723 = vadd.s32 %v713, %v717
      %v724 = vadd.s32 %v716, %v722
      %vm725 = vc.u32 %v723, %v719
      %v726 = vsel %vm725, 1, 0
      %v727 = vadd.s32 %v723, %v719
      %v728 = vadd.s32 %v724, %v726
      %v729 = vadd.s32 %v728, %v718
      %v730 = vadd.s32 %v729, %v720
      %v731 = vmul.u32 %v686, %v677
      %v732 = vadd.s32 %v708, %v727
      %vm733 = vc.u32 %v708, %v727
      %v734 = vadd.s32 %v730, 1
      %v735 = vsel %vm733, %v734, %v730
      %v736 = vadd.s32 %v731, %v735
      %v737 = vadd.s32 %v736, 536870912
      %v738 = vshrl.u32 %v737, 30
      %v739 = vshll.u32 %v738, 30
      %v740 = vsub.s32 %v736, %v739
      %vm741 = vcmp.lt.s32.totalorder %v740, 0
      %v742 = vsub.s32 0, %v740
      %v743 = vsel %vm741, %v742, %v740
      %v744 = vclz %v743
      %v745 = vsub.s32 %v744, 2
      %vm746 = vcmp.gt.s32.totalorder 0, %v745
      %v747 = vsel %vm746, 0, %v745
      %v748 = vsub.s32 32, %v747
      %v749 = vshll.u32 %v740, %v747
      %v750 = vshrl.u32 %v732, %v748
      %v751 = vor.u32 %v749, %v750
      %v752 = vsub.s32 4294967266, %v747
      %v753 = vadd.s32 %v752, 127
      %v754 = vshll.u32 %v753, 23
      %v755 = vor.u32 4788187, %v754
      %v756 = vand.u32 2147483647, %v755
      %v758 = vcvt.s32.f32 %v751
      %v759 = vmul.f32 %v758, %v756
      %v760 = vxor.u32 %v759, 2147483648
      %v761 = vsel %vm640, %v760, %v759
      %v762 = vsub.s32 4, %v738
      %v763 = vsel %vm640, %v762, %v738
      %v764 = vsel %vm639, %v326, %v761
      %v765 = vsel %vm639, 0, %v763
      %v766 = vmul.f32 %v764, %v764
      %v767 = vmul.f32 %v766, -0.001358992
      %v768 = vadd.f32 %v767, 0.041655596
      %v769 = vmul.f32 %v766, %v768
      %v770 = vadd.f32 %v769, -0.4999988
      %v771 = vmul.f32 %v766, %v770
      %v772 = vadd.f32 1.0, %v771
      %v773 = vmul.f32 %v764, %v764
      %v774 = vmul.f32 %v773, -0.00019511016
      %v775 = vadd.f32 %v774, 0.008332121
      %v776 = vmul.f32 %v773, %v775
      %v777 = vadd.f32 %v776, -0.16666654
      %v778 = vmul.f32 %v773, %v777
      %v779 = vadd.f32 %v778, 1.0
      %v780 = vmul.f32 %v779, %v764
      %vm781 = vweird.f32 %v326
      %v782 = vadd.s32 %v765, 3
      %v783 = vand.u32 %v782, 3
      %vm784 = vcmp.lt.s32.totalorder %v783, 2
      %vm785 = vcmp.eq.s32.totalorder %v783, 0
      %v786 = vxor.u32 %v780, 2147483648
      %v787 = vsel %vm785, %v772, %v786
      %vm788 = vcmp.eq.s32.totalorder %v783, 2
      %v789 = vxor.u32 %v772, 2147483648
      %v790 = vsel %vm788, %v789, %v780
      %v791 = vsel %vm784, %v787, %v790
      %v792 = vsel %vm781, nan, %v791
      %v793 = vand.u32 2147483647, %v327
      %vm794 = vcmp.le.f32.partialorder %v793, 0.7853982
      %vm795 = vcmp.lt.s32.totalorder %v327, 0
      %v796 = vand.u32 %v327, 2139095040
      %v797 = vshrl.u32 %v796, 23
      %v798 = vsub.s32 %v797, 127
      %v799 = vand.u32 2147483647, %v327
      %v800 = vand.u32 %v799, 8388607
      %v801 = vor.u32 %v800, 8388608
      %v802 = vsub.s32 0, %v801
      %v803 = vadd.s32 %v798, 1
      %vm804 = vcmp.gt.s32.totalorder %v803, 0
      %v805 = vsel %vm804, %v803, 0
      %v806 = vshrl.u32 %v805, 5
      %v807 = vand.u32 %v805, 31
      %v808 = vsub.s32 32, %v807
      %v809 = vshrl.u32 683565275, %v808
      %v810 = vshll.u32 683565275, %v807
      %v811 = vshrl.u32 2475754826, %v808
      %v812 = vor.u32 %v810, %v811
      %v813 = vshll.u32 2475754826, %v807
      %v814 = vshrl.u32 2131351028, %v808
      %v815 = vor.u32 %v813, %v814
      %v816 = vshll.u32 2131351028, %v807
      %v817 = vshrl.u32 2102212464, %v808
      %v818 = vor.u32 %v816, %v817
      %v819 = vshll.u32 2102212464, %v807
      %v820 = vshrl.u32 920167782, %v808
      %v821 = vor.u32 %v819, %v820
      %v822 = vshll.u32 920167782, %v807
      %v823 = vshrl.u32 1326507024, %v808
      %v824 = vor.u32 %v822, %v823
      %vm825 = vcmp.lt.s32.totalorder %v806, 1
      %vm826 = vcmp.lt.s32.totalorder %v806, 2
      %vm827 = vcmp.lt.s32.totalorder %v806, 3
      %vm828 = vcmp.lt.s32.totalorder %v806, 4
      %v829 = vsel %vm825, %v809, %v812
      %v830 = vsel %vm828, %v818, 2102212464
      %v831 = vsel %vm827, %v815, %v830
      %v832 = vsel %vm826, %v829, %v831
      %v833 = vsel %vm825, %v812, %v815
      %v834 = vsel %vm828, %v821, 920167782
      %v835 = vsel %vm827, %v818, %v834
      %v836 = vsel %vm826, %v833, %v835
      %v837 = vsel %vm825, %v815, %v818
      %v838 = vsel %vm828, %v824, 1326507024
      %v839 = vsel %vm827, %v821, %v838
      %v840 = vsel %vm826, %v837, %v839
      %v841 = vshll.u32 %v801, 8
      %v842 = vand.u32 %v841, 65535
      %v843 = vshrl.u32 %v841, 16
      %v844 = vand.u32 %v840, 65535
      %v845 = vshrl.u32 %v840, 16
      %v846 = vmul.u32 %v842, %v844
      %v847 = vmul.u32 %v842, %v845
      %v848 = vmul.u32 %v843, %v844
      %v849 = vmul.u32 %v843, %v845
      %v850 = vshll.u32 %v847, 16
      %v851 = vshrl.u32 %v847, 16
      %v852 = vshll.u32 %v848, 16
      %v853 = vshrl.u32 %v848, 16
      %vm854 = vc.u32 %v846, %v850
      %v855 = vsel %vm854, 1, 0
      %v856 = vadd.s32 %v846, %v850
      %v857 = vadd.s32 %v849, %v855
      %vm858 = vc.u32 %v856, %v852
      %v859 = vsel %vm858, 1, 0
      %v860 = vadd.s32 %v856, %v852
      %v861 = vadd.s32 %v857, %v859
      %v862 = vadd.s32 %v861, %v851
      %v863 = vadd.s32 %v862, %v853
      %v864 = vand.u32 %v841, 65535
      %v865 = vshrl.u32 %v841, 16
      %v866 = vand.u32 %v836, 65535
      %v867 = vshrl.u32 %v836, 16
      %v868 = vmul.u32 %v864, %v866
      %v869 = vmul.u32 %v864, %v867
      %v870 = vmul.u32 %v865, %v866
      %v871 = vmul.u32 %v865, %v867
      %v872 = vshll.u32 %v869, 16
      %v873 = vshrl.u32 %v869, 16
      %v874 = vshll.u32 %v870, 16
      %v875 = vshrl.u32 %v870, 16
      %vm876 = vc.u32 %v868, %v872
      %v877 = vsel %vm876, 1, 0
      %v878 = vadd.s32 %v868, %v872
      %v879 = vadd.s32 %v871, %v877
      %vm880 = vc.u32 %v878, %v874
      %v881 = vsel %vm880, 1, 0
      %v882 = vadd.s32 %v878, %v874
      %v883 = vadd.s32 %v879, %v881
      %v884 = vadd.s32 %v883, %v873
      %v885 = vadd.s32 %v884, %v875
      %v886 = vmul.u32 %v841, %v832
      %v887 = vadd.s32 %v863, %v882
      %vm888 = vc.u32 %v863, %v882
      %v889 = vadd.s32 %v885, 1
      %v890 = vsel %vm888, %v889, %v885
      %v891 = vadd.s32 %v886, %v890
      %v892 = vadd.s32 %v891, 536870912
      %v893 = vshrl.u32 %v892, 30
      %v894 = vshll.u32 %v893, 30
      %v895 = vsub.s32 %v891, %v894
      %vm896 = vcmp.lt.s32.totalorder %v895, 0
      %v897 = vsub.s32 0, %v895
      %v898 = vsel %vm896, %v897, %v895
      %v899 = vclz %v898
      %v900 = vsub.s32 %v899, 2
      %vm901 = vcmp.gt.s32.totalorder 0, %v900
      %v902 = vsel %vm901, 0, %v900
      %v903 = vsub.s32 32, %v902
      %v904 = vshll.u32 %v895, %v902
      %v905 = vshrl.u32 %v887, %v903
      %v906 = vor.u32 %v904, %v905
      %v907 = vsub.s32 4294967266, %v902
      %v908 = vadd.s32 %v907, 127
      %v909 = vshll.u32 %v908, 23
      %v910 = vor.u32 4788187, %v909
      %v911 = vand.u32 2147483647, %v910
      %v913 = vcvt.s32.f32 %v906
      %v914 = vmul.f32 %v913, %v911
      %v915 = vxor.u32 %v914, 2147483648
      %v916 = vsel %vm795, %v915, %v914
      %v917 = vsub.s32 4, %v893
      %v918 = vsel %vm795, %v917, %v893
      %v919 = vsel %vm794, %v327, %v916
      %v920 = vsel %vm794, 0, %v918
      %v921 = vmul.f32 %v919, %v919
      %v922 = vmul.f32 %v921, -0.001358992
      %v923 = vadd.f32 %v922, 0.041655596
      %v924 = vmul.f32 %v921, %v923
      %v925 = vadd.f32 %v924, -0.4999988
      %v926 = vmul.f32 %v921, %v925
      %v927 = vadd.f32 1.0, %v926
      %v928 = vmul.f32 %v919, %v919
      %v929 = vmul.f32 %v928, -0.00019511016
      %v930 = vadd.f32 %v929, 0.008332121
      %v931 = vmul.f32 %v928, %v930
      %v932 = vadd.f32 %v931, -0.16666654
      %v933 = vmul.f32 %v928, %v932
      %v934 = vadd.f32 %v933, 1.0
      %v935 = vmul.f32 %v934, %v919
      %vm936 = vweird.f32 %v327
      %v937 = vadd.s32 %v920, 3
      %v938 = vand.u32 %v937, 3
      %vm939 = vcmp.lt.s32.totalorder %v938, 2
      %vm940 = vcmp.eq.s32.totalorder %v938, 0
      %v941 = vxor.u32 %v935, 2147483648
      %v942 = vsel %vm940, %v927, %v941
      %vm943 = vcmp.eq.s32.totalorder %v938, 2
      %v944 = vxor.u32 %v927, 2147483648
      %v945 = vsel %vm943, %v944, %v935
      %v946 = vsel %vm939, %v942, %v945
      %v947 = vsel %vm936, nan, %v946
      %v948 = vand.u32 2147483647, %v324
      %vm949 = vcmp.le.f32.partialorder %v948, 0.7853982
      %vm950 = vcmp.lt.s32.totalorder %v324, 0
      %v951 = vand.u32 %v324, 2139095040
      %v952 = vshrl.u32 %v951, 23
      %v953 = vsub.s32 %v952, 127
      %v954 = vand.u32 2147483647, %v324
      %v955 = vand.u32 %v954, 8388607
      %v956 = vor.u32 %v955, 8388608
      %v957 = vsub.s32 0, %v956
      %v958 = vadd.s32 %v953, 1
      %vm959 = vcmp.gt.s32.totalorder %v958, 0
      %v960 = vsel %vm959, %v958, 0
      %v961 = vshrl.u32 %v960, 5
      %v962 = vand.u32 %v960, 31
      %v963 = vsub.s32 32, %v962
      %v964 = vshrl.u32 683565275, %v963
      %v965 = vshll.u32 683565275, %v962
      %v966 = vshrl.u32 2475754826, %v963
      %v967 = vor.u32 %v965, %v966
      %v968 = vshll.u32 2475754826, %v962
      %v969 = vshrl.u32 2131351028, %v963
      %v970 = vor.u32 %v968, %v969
      %v971 = vshll.u32 2131351028, %v962
      %v972 = vshrl.u32 2102212464, %v963
      %v973 = vor.u32 %v971, %v972
      %v974 = vshll.u32 2102212464, %v962
      %v975 = vshrl.u32 920167782, %v963
      %v976 = vor.u32 %v974, %v975
      %v977 = vshll.u32 920167782, %v962
      %v978 = vshrl.u32 1326507024, %v963
      %v979 = vor.u32 %v977, %v978
      %vm980 = vcmp.lt.s32.totalorder %v961, 1
      %vm981 = vcmp.lt.s32.totalorder %v961, 2
      %vm982 = vcmp.lt.s32.totalorder %v961, 3
      %vm983 = vcmp.lt.s32.totalorder %v961, 4
      %v984 = vsel %vm980, %v964, %v967
      %v985 = vsel %vm983, %v973, 2102212464
      %v986 = vsel %vm982, %v970, %v985
      %v987 = vsel %vm981, %v984, %v986
      %v988 = vsel %vm980, %v967, %v970
      %v989 = vsel %vm983, %v976, 920167782
      %v990 = vsel %vm982, %v973, %v989
      %v991 = vsel %vm981, %v988, %v990
      %v992 = vsel %vm980, %v970, %v973
      %v993 = vsel %vm983, %v979, 1326507024
      %v994 = vsel %vm982, %v976, %v993
      %v995 = vsel %vm981, %v992, %v994
      %v996 = vshll.u32 %v956, 8
      %v997 = vand.u32 %v996, 65535
      %v998 = vshrl.u32 %v996, 16
      %v999 = vand.u32 %v995, 65535
      %v1000 = vshrl.u32 %v995, 16
      %v1001 = vmul.u32 %v997, %v999
      %v1002 = vmul.u32 %v997, %v1000
      %v1003 = vmul.u32 %v998, %v999
      %v1004 = vmul.u32 %v998, %v1000
      %v1005 = vshll.u32 %v1002, 16
      %v1006 = vshrl.u32 %v1002, 16
      %v1007 = vshll.u32 %v1003, 16
      %v1008 = vshrl.u32 %v1003, 16
      %vm1009 = vc.u32 %v1001, %v1005
      %v1010 = vsel %vm1009, 1, 0
      %v1011 = vadd.s32 %v1001, %v1005
      %v1012 = vadd.s32 %v1004, %v1010
      %vm1013 = vc.u32 %v1011, %v1007
      %v1014 = vsel %vm1013, 1, 0
      %v1015 = vadd.s32 %v1011, %v1007
      %v1016 = vadd.s32 %v1012, %v1014
      %v1017 = vadd.s32 %v1016, %v1006
      %v1018 = vadd.s32 %v1017, %v1008
      %v1019 = vand.u32 %v996, 65535
      %v1020 = vshrl.u32 %v996, 16
      %v1021 = vand.u32 %v991, 65535
      %v1022 = vshrl.u32 %v991, 16
      %v1023 = vmul.u32 %v1019, %v1021
      %v1024 = vmul.u32 %v1019, %v1022
      %v1025 = vmul.u32 %v1020, %v1021
      %v1026 = vmul.u32 %v1020, %v1022
      %v1027 = vshll.u32 %v1024, 16
      %v1028 = vshrl.u32 %v1024, 16
      %v1029 = vshll.u32 %v1025, 16
      %v1030 = vshrl.u32 %v1025, 16
      %vm1031 = vc.u32 %v1023, %v1027
      %v1032 = vsel %vm1031, 1, 0
      %v1033 = vadd.s32 %v1023, %v1027
      %v1034 = vadd.s32 %v1026, %v1032
      %vm1035 = vc.u32 %v1033, %v1029
      %v1036 = vsel %vm1035, 1, 0
      %v1037 = vadd.s32 %v1033, %v1029
      %v1038 = vadd.s32 %v1034, %v1036
      %v1039 = vadd.s32 %v1038, %v1028
      %v1040 = vadd.s32 %v1039, %v1030
      %v1041 = vmul.u32 %v996, %v987
      %v1042 = vadd.s32 %v1018, %v1037
      %vm1043 = vc.u32 %v1018, %v1037
      %v1044 = vadd.s32 %v1040, 1
      %v1045 = vsel %vm1043, %v1044, %v1040
      %v1046 = vadd.s32 %v1041, %v1045
      %v1047 = vadd.s32 %v1046, 536870912
      %v1048 = vshrl.u32 %v1047, 30
      %v1049 = vshll.u32 %v1048, 30
      %v1050 = vsub.s32 %v1046, %v1049
      %vm1051 = vcmp.lt.s32.totalorder %v1050, 0
      %v1052 = vsub.s32 0, %v1050
      %v1053 = vsel %vm1051, %v1052, %v1050
      %v1054 = vclz %v1053
      %v1055 = vsub.s32 %v1054, 2
      %vm1056 = vcmp.gt.s32.totalorder 0, %v1055
      %v1057 = vsel %vm1056, 0, %v1055
      %v1058 = vsub.s32 32, %v1057
      %v1059 = vshll.u32 %v1050, %v1057
      %v1060 = vshrl.u32 %v1042, %v1058
      %v1061 = vor.u32 %v1059, %v1060
      %v1062 = vsub.s32 4294967266, %v1057
      %v1063 = vadd.s32 %v1062, 127
      %v1064 = vshll.u32 %v1063, 23
      %v1065 = vor.u32 4788187, %v1064
      %v1066 = vand.u32 2147483647, %v1065
      %v1068 = vcvt.s32.f32 %v1061
      %v1069 = vmul.f32 %v1068, %v1066
      %v1070 = vxor.u32 %v1069, 2147483648
      %v1071 = vsel %vm950, %v1070, %v1069
      %v1072 = vsub.s32 4, %v1048
      %v1073 = vsel %vm950, %v1072, %v1048
      %v1074 = vsel %vm949, %v324, %v1071
      %v1075 = vsel %vm949, 0, %v1073
      %v1076 = vmul.f32 %v1074, %v1074
      %v1077 = vmul.f32 %v1076, -0.001358992
      %v1078 = vadd.f32 %v1077, 0.041655596
      %v1079 = vmul.f32 %v1076, %v1078
      %v1080 = vadd.f32 %v1079, -0.4999988
      %v1081 = vmul.f32 %v1076, %v1080
      %v1082 = vadd.f32 1.0, %v1081
      %v1083 = vmul.f32 %v1074, %v1074
      %v1084 = vmul.f32 %v1083, -0.00019511016
      %v1085 = vadd.f32 %v1084, 0.008332121
      %v1086 = vmul.f32 %v1083, %v1085
      %v1087 = vadd.f32 %v1086, -0.16666654
      %v1088 = vmul.f32 %v1083, %v1087
      %v1089 = vadd.f32 %v1088, 1.0
      %v1090 = vmul.f32 %v1089, %v1074
      %vm1091 = vweird.f32 %v324
      %v1092 = vand.u32 %v1075, 3
      %vm1093 = vcmp.lt.s32.totalorder %v1092, 2
      %vm1094 = vcmp.eq.s32.totalorder %v1092, 0
      %v1095 = vxor.u32 %v1090, 2147483648
      %v1096 = vsel %vm1094, %v1082, %v1095
      %vm1097 = vcmp.eq.s32.totalorder %v1092, 2
      %v1098 = vxor.u32 %v1082, 2147483648
      %v1099 = vsel %vm1097, %v1098, %v1090
      %v1100 = vsel %vm1093, %v1096, %v1099
      %v1101 = vsel %vm1091, nan, %v1100
      %v1102 = vand.u32 2147483647, %v325
      %vm1103 = vcmp.le.f32.partialorder %v1102, 0.7853982
      %vm1104 = vcmp.lt.s32.totalorder %v325, 0
      %v1105 = vand.u32 %v325, 2139095040
      %v1106 = vshrl.u32 %v1105, 23
      %v1107 = vsub.s32 %v1106, 127
      %v1108 = vand.u32 2147483647, %v325
      %v1109 = vand.u32 %v1108, 8388607
      %v1110 = vor.u32 %v1109, 8388608
      %v1111 = vsub.s32 0, %v1110
      %v1112 = vadd.s32 %v1107, 1
      %vm1113 = vcmp.gt.s32.totalorder %v1112, 0
      %v1114 = vsel %vm1113, %v1112, 0
      %v1115 = vshrl.u32 %v1114, 5
      %v1116 = vand.u32 %v1114, 31
      %v1117 = vsub.s32 32, %v1116
      %v1118 = vshrl.u32 683565275, %v1117
      %v1119 = vshll.u32 683565275, %v1116
      %v1120 = vshrl.u32 2475754826, %v1117
      %v1121 = vor.u32 %v1119, %v1120
      %v1122 = vshll.u32 2475754826, %v1116
      %v1123 = vshrl.u32 2131351028, %v1117
      %v1124 = vor.u32 %v1122, %v1123
      %v1125 = vshll.u32 2131351028, %v1116
      %v1126 = vshrl.u32 2102212464, %v1117
      %v1127 = vor.u32 %v1125, %v1126
      %v1128 = vshll.u32 2102212464, %v1116
      %v1129 = vshrl.u32 920167782, %v1117
      %v1130 = vor.u32 %v1128, %v1129
      %v1131 = vshll.u32 920167782, %v1116
      %v1132 = vshrl.u32 1326507024, %v1117
      %v1133 = vor.u32 %v1131, %v1132
      %vm1134 = vcmp.lt.s32.totalorder %v1115, 1
      %vm1135 = vcmp.lt.s32.totalorder %v1115, 2
      %vm1136 = vcmp.lt.s32.totalorder %v1115, 3
      %vm1137 = vcmp.lt.s32.totalorder %v1115, 4
      %v1138 = vsel %vm1134, %v1118, %v1121
      %v1139 = vsel %vm1137, %v1127, 2102212464
      %v1140 = vsel %vm1136, %v1124, %v1139
      %v1141 = vsel %vm1135, %v1138, %v1140
      %v1142 = vsel %vm1134, %v1121, %v1124
      %v1143 = vsel %vm1137, %v1130, 920167782
      %v1144 = vsel %vm1136, %v1127, %v1143
      %v1145 = vsel %vm1135, %v1142, %v1144
      %v1146 = vsel %vm1134, %v1124, %v1127
      %v1147 = vsel %vm1137, %v1133, 1326507024
      %v1148 = vsel %vm1136, %v1130, %v1147
      %v1149 = vsel %vm1135, %v1146, %v1148
      %v1150 = vshll.u32 %v1110, 8
      %v1151 = vand.u32 %v1150, 65535
      %v1152 = vshrl.u32 %v1150, 16
      %v1153 = vand.u32 %v1149, 65535
      %v1154 = vshrl.u32 %v1149, 16
      %v1155 = vmul.u32 %v1151, %v1153
      %v1156 = vmul.u32 %v1151, %v1154
      %v1157 = vmul.u32 %v1152, %v1153
      %v1158 = vmul.u32 %v1152, %v1154
      %v1159 = vshll.u32 %v1156, 16
      %v1160 = vshrl.u32 %v1156, 16
      %v1161 = vshll.u32 %v1157, 16
      %v1162 = vshrl.u32 %v1157, 16
      %vm1163 = vc.u32 %v1155, %v1159
      %v1164 = vsel %vm1163, 1, 0
      %v1165 = vadd.s32 %v1155, %v1159
      %v1166 = vadd.s32 %v1158, %v1164
      %vm1167 = vc.u32 %v1165, %v1161
      %v1168 = vsel %vm1167, 1, 0
      %v1169 = vadd.s32 %v1165, %v1161
      %v1170 = vadd.s32 %v1166, %v1168
      %v1171 = vadd.s32 %v1170, %v1160
      %v1172 = vadd.s32 %v1171, %v1162
      %v1173 = vand.u32 %v1150, 65535
      %v1174 = vshrl.u32 %v1150, 16
      %v1175 = vand.u32 %v1145, 65535
      %v1176 = vshrl.u32 %v1145, 16
      %v1177 = vmul.u32 %v1173, %v1175
      %v1178 = vmul.u32 %v1173, %v1176
      %v1179 = vmul.u32 %v1174, %v1175
      %v1180 = vmul.u32 %v1174, %v1176
      %v1181 = vshll.u32 %v1178, 16
      %v1182 = vshrl.u32 %v1178, 16
      %v1183 = vshll.u32 %v1179, 16
      %v1184 = vshrl.u32 %v1179, 16
      %vm1185 = vc.u32 %v1177, %v1181
      %v1186 = vsel %vm1185, 1, 0
      %v1187 = vadd.s32 %v1177, %v1181
      %v1188 = vadd.s32 %v1180, %v1186
      %vm1189 = vc.u32 %v1187, %v1183
      %v1190 = vsel %vm1189, 1, 0
      %v1191 = vadd.s32 %v1187, %v1183
      %v1192 = vadd.s32 %v1188, %v1190
      %v1193 = vadd.s32 %v1192, %v1182
      %v1194 = vadd.s32 %v1193, %v1184
      %v1195 = vmul.u32 %v1150, %v1141
      %v1196 = vadd.s32 %v1172, %v1191
      %vm1197 = vc.u32 %v1172, %v1191
      %v1198 = vadd.s32 %v1194, 1
      %v1199 = vsel %vm1197, %v1198, %v1194
      %v1200 = vadd.s32 %v1195, %v1199
      %v1201 = vadd.s32 %v1200, 536870912
      %v1202 = vshrl.u32 %v1201, 30
      %v1203 = vshll.u32 %v1202, 30
      %v1204 = vsub.s32 %v1200, %v1203
      %vm1205 = vcmp.lt.s32.totalorder %v1204, 0
      %v1206 = vsub.s32 0, %v1204
      %v1207 = vsel %vm1205, %v1206, %v1204
      %v1208 = vclz %v1207
      %v1209 = vsub.s32 %v1208, 2
      %vm1210 = vcmp.gt.s32.totalorder 0, %v1209
      %v1211 = vsel %vm1210, 0, %v1209
      %v1212 = vsub.s32 32, %v1211
      %v1213 = vshll.u32 %v1204, %v1211
      %v1214 = vshrl.u32 %v1196, %v1212
      %v1215 = vor.u32 %v1213, %v1214
      %v1216 = vsub.s32 4294967266, %v1211
      %v1217 = vadd.s32 %v1216, 127
      %v1218 = vshll.u32 %v1217, 23
      %v1219 = vor.u32 4788187, %v1218
      %v1220 = vand.u32 2147483647, %v1219
      %v1222 = vcvt.s32.f32 %v1215
      %v1223 = vmul.f32 %v1222, %v1220
      %v1224 = vxor.u32 %v1223, 2147483648
      %v1225 = vsel %vm1104, %v1224, %v1223
      %v1226 = vsub.s32 4, %v1202
      %v1227 = vsel %vm1104, %v1226, %v1202
      %v1228 = vsel %vm1103, %v325, %v1225
      %v1229 = vsel %vm1103, 0, %v1227
      %v1230 = vmul.f32 %v1228, %v1228
      %v1231 = vmul.f32 %v1230, -0.001358992
      %v1232 = vadd.f32 %v1231, 0.041655596
      %v1233 = vmul.f32 %v1230, %v1232
      %v1234 = vadd.f32 %v1233, -0.4999988
      %v1235 = vmul.f32 %v1230, %v1234
      %v1236 = vadd.f32 1.0, %v1235
      %v1237 = vmul.f32 %v1228, %v1228
      %v1238 = vmul.f32 %v1237, -0.00019511016
      %v1239 = vadd.f32 %v1238, 0.008332121
      %v1240 = vmul.f32 %v1237, %v1239
      %v1241 = vadd.f32 %v1240, -0.16666654
      %v1242 = vmul.f32 %v1237, %v1241
      %v1243 = vadd.f32 %v1242, 1.0
      %v1244 = vmul.f32 %v1243, %v1228
      %vm1245 = vweird.f32 %v325
      %v1246 = vand.u32 %v1229, 3
      %vm1247 = vcmp.lt.s32.totalorder %v1246, 2
      %vm1248 = vcmp.eq.s32.totalorder %v1246, 0
      %v1249 = vxor.u32 %v1244, 2147483648
      %v1250 = vsel %vm1248, %v1236, %v1249
      %vm1251 = vcmp.eq.s32.totalorder %v1246, 2
      %v1252 = vxor.u32 %v1236, 2147483648
      %v1253 = vsel %vm1251, %v1252, %v1244
      %v1254 = vsel %vm1247, %v1250, %v1253
      %v1255 = vsel %vm1245, nan, %v1254
      %v1256 = vand.u32 2147483647, %v326
      %vm1257 = vcmp.le.f32.partialorder %v1256, 0.7853982
      %vm1258 = vcmp.lt.s32.totalorder %v326, 0
      %v1259 = vand.u32 %v326, 2139095040
      %v1260 = vshrl.u32 %v1259, 23
      %v1261 = vsub.s32 %v1260, 127
      %v1262 = vand.u32 2147483647, %v326
      %v1263 = vand.u32 %v1262, 8388607
      %v1264 = vor.u32 %v1263, 8388608
      %v1265 = vsub.s32 0, %v1264
      %v1266 = vadd.s32 %v1261, 1
      %vm1267 = vcmp.gt.s32.totalorder %v1266, 0
      %v1268 = vsel %vm1267, %v1266, 0
      %v1269 = vshrl.u32 %v1268, 5
      %v1270 = vand.u32 %v1268, 31
      %v1271 = vsub.s32 32, %v1270
      %v1272 = vshrl.u32 683565275, %v1271
      %v1273 = vshll.u32 683565275, %v1270
      %v1274 = vshrl.u32 2475754826, %v1271
      %v1275 = vor.u32 %v1273, %v1274
      %v1276 = vshll.u32 2475754826, %v1270
      %v1277 = vshrl.u32 2131351028, %v1271
      %v1278 = vor.u32 %v1276, %v1277
      %v1279 = vshll.u32 2131351028, %v1270
      %v1280 = vshrl.u32 2102212464, %v1271
      %v1281 = vor.u32 %v1279, %v1280
      %v1282 = vshll.u32 2102212464, %v1270
      %v1283 = vshrl.u32 920167782, %v1271
      %v1284 = vor.u32 %v1282, %v1283
      %v1285 = vshll.u32 920167782, %v1270
      %v1286 = vshrl.u32 1326507024, %v1271
      %v1287 = vor.u32 %v1285, %v1286
      %vm1288 = vcmp.lt.s32.totalorder %v1269, 1
      %vm1289 = vcmp.lt.s32.totalorder %v1269, 2
      %vm1290 = vcmp.lt.s32.totalorder %v1269, 3
      %vm1291 = vcmp.lt.s32.totalorder %v1269, 4
      %v1292 = vsel %vm1288, %v1272, %v1275
      %v1293 = vsel %vm1291, %v1281, 2102212464
      %v1294 = vsel %vm1290, %v1278, %v1293
      %v1295 = vsel %vm1289, %v1292, %v1294
      %v1296 = vsel %vm1288, %v1275, %v1278
      %v1297 = vsel %vm1291, %v1284, 920167782
      %v1298 = vsel %vm1290, %v1281, %v1297
      %v1299 = vsel %vm1289, %v1296, %v1298
      %v1300 = vsel %vm1288, %v1278, %v1281
      %v1301 = vsel %vm1291, %v1287, 1326507024
      %v1302 = vsel %vm1290, %v1284, %v1301
      %v1303 = vsel %vm1289, %v1300, %v1302
      %v1304 = vshll.u32 %v1264, 8
      %v1305 = vand.u32 %v1304, 65535
      %v1306 = vshrl.u32 %v1304, 16
      %v1307 = vand.u32 %v1303, 65535
      %v1308 = vshrl.u32 %v1303, 16
      %v1309 = vmul.u32 %v1305, %v1307
      %v1310 = vmul.u32 %v1305, %v1308
      %v1311 = vmul.u32 %v1306, %v1307
      %v1312 = vmul.u32 %v1306, %v1308
      %v1313 = vshll.u32 %v1310, 16
      %v1314 = vshrl.u32 %v1310, 16
      %v1315 = vshll.u32 %v1311, 16
      %v1316 = vshrl.u32 %v1311, 16
      %vm1317 = vc.u32 %v1309, %v1313
      %v1318 = vsel %vm1317, 1, 0
      %v1319 = vadd.s32 %v1309, %v1313
      %v1320 = vadd.s32 %v1312, %v1318
      %vm1321 = vc.u32 %v1319, %v1315
      %v1322 = vsel %vm1321, 1, 0
      %v1323 = vadd.s32 %v1319, %v1315
      %v1324 = vadd.s32 %v1320, %v1322
      %v1325 = vadd.s32 %v1324, %v1314
      %v1326 = vadd.s32 %v1325, %v1316
      %v1327 = vand.u32 %v1304, 65535
      %v1328 = vshrl.u32 %v1304, 16
      %v1329 = vand.u32 %v1299, 65535
      %v1330 = vshrl.u32 %v1299, 16
      %v1331 = vmul.u32 %v1327, %v1329
      %v1332 = vmul.u32 %v1327, %v1330
      %v1333 = vmul.u32 %v1328, %v1329
      %v1334 = vmul.u32 %v1328, %v1330
      %v1335 = vshll.u32 %v1332, 16
      %v1336 = vshrl.u32 %v1332, 16
      %v1337 = vshll.u32 %v1333, 16
      %v1338 = vshrl.u32 %v1333, 16
      %vm1339 = vc.u32 %v1331, %v1335
      %v1340 = vsel %vm1339, 1, 0
      %v1341 = vadd.s32 %v1331, %v1335
      %v1342 = vadd.s32 %v1334, %v1340
      %vm1343 = vc.u32 %v1341, %v1337
      %v1344 = vsel %vm1343, 1, 0
      %v1345 = vadd.s32 %v1341, %v1337
      %v1346 = vadd.s32 %v1342, %v1344
      %v1347 = vadd.s32 %v1346, %v1336
      %v1348 = vadd.s32 %v1347, %v1338
      %v1349 = vmul.u32 %v1304, %v1295
      %v1350 = vadd.s32 %v1326, %v1345
      %vm1351 = vc.u32 %v1326, %v1345
      %v1352 = vadd.s32 %v1348, 1
      %v1353 = vsel %vm1351, %v1352, %v1348
      %v1354 = vadd.s32 %v1349, %v1353
      %v1355 = vadd.s32 %v1354, 536870912
      %v1356 = vshrl.u32 %v1355, 30
      %v1357 = vshll.u32 %v1356, 30
      %v1358 = vsub.s32 %v1354, %v1357
      %vm1359 = vcmp.lt.s32.totalorder %v1358, 0
      %v1360 = vsub.s32 0, %v1358
      %v1361 = vsel %vm1359, %v1360, %v1358
      %v1362 = vclz %v1361
      %v1363 = vsub.s32 %v1362, 2
      %vm1364 = vcmp.gt.s32.totalorder 0, %v1363
      %v1365 = vsel %vm1364, 0, %v1363
      %v1366 = vsub.s32 32, %v1365
      %v1367 = vshll.u32 %v1358, %v1365
      %v1368 = vshrl.u32 %v1350, %v1366
      %v1369 = vor.u32 %v1367, %v1368
      %v1370 = vsub.s32 4294967266, %v1365
      %v1371 = vadd.s32 %v1370, 127
      %v1372 = vshll.u32 %v1371, 23
      %v1373 = vor.u32 4788187, %v1372
      %v1374 = vand.u32 2147483647, %v1373
      %v1376 = vcvt.s32.f32 %v1369
      %v1377 = vmul.f32 %v1376, %v1374
      %v1378 = vxor.u32 %v1377, 2147483648
      %v1379 = vsel %vm1258, %v1378, %v1377
      %v1380 = vsub.s32 4, %v1356
      %v1381 = vsel %vm1258, %v1380, %v1356
      %v1382 = vsel %vm1257, %v326, %v1379
      %v1383 = vsel %vm1257, 0, %v1381
      %v1384 = vmul.f32 %v1382, %v1382
      %v1385 = vmul.f32 %v1384, -0.001358992
      %v1386 = vadd.f32 %v1385, 0.041655596
      %v1387 = vmul.f32 %v1384, %v1386
      %v1388 = vadd.f32 %v1387, -0.4999988
      %v1389 = vmul.f32 %v1384, %v1388
      %v1390 = vadd.f32 1.0, %v1389
      %v1391 = vmul.f32 %v1382, %v1382
      %v1392 = vmul.f32 %v1391, -0.00019511016
      %v1393 = vadd.f32 %v1392, 0.008332121
      %v1394 = vmul.f32 %v1391, %v1393
      %v1395 = vadd.f32 %v1394, -0.16666654
      %v1396 = vmul.f32 %v1391, %v1395
      %v1397 = vadd.f32 %v1396, 1.0
      %v1398 = vmul.f32 %v1397, %v1382
      %vm1399 = vweird.f32 %v326
      %v1400 = vand.u32 %v1383, 3
      %vm1401 = vcmp.lt.s32.totalorder %v1400, 2
      %vm1402 = vcmp.eq.s32.totalorder %v1400, 0
      %v1403 = vxor.u32 %v1398, 2147483648
      %v1404 = vsel %vm1402, %v1390, %v1403
      %vm1405 = vcmp.eq.s32.totalorder %v1400, 2
      %v1406 = vxor.u32 %v1390, 2147483648
      %v1407 = vsel %vm1405, %v1406, %v1398
      %v1408 = vsel %vm1401, %v1404, %v1407
      %v1409 = vsel %vm1399, nan, %v1408
      %v1410 = vand.u32 2147483647, %v327
      %vm1411 = vcmp.le.f32.partialorder %v1410, 0.7853982
      %vm1412 = vcmp.lt.s32.totalorder %v327, 0
      %v1413 = vand.u32 %v327, 2139095040
      %v1414 = vshrl.u32 %v1413, 23
      %v1415 = vsub.s32 %v1414, 127
      %v1416 = vand.u32 2147483647, %v327
      %v1417 = vand.u32 %v1416, 8388607
      %v1418 = vor.u32 %v1417, 8388608
      %v1419 = vsub.s32 0, %v1418
      %v1420 = vadd.s32 %v1415, 1
      %vm1421 = vcmp.gt.s32.totalorder %v1420, 0
      %v1422 = vsel %vm1421, %v1420, 0
      %v1423 = vshrl.u32 %v1422, 5
      %v1424 = vand.u32 %v1422, 31
      %v1425 = vsub.s32 32, %v1424
      %v1426 = vshrl.u32 683565275, %v1425
      %v1427 = vshll.u32 683565275, %v1424
      %v1428 = vshrl.u32 2475754826, %v1425
      %v1429 = vor.u32 %v1427, %v1428
      %v1430 = vshll.u32 2475754826, %v1424
      %v1431 = vshrl.u32 2131351028, %v1425
      %v1432 = vor.u32 %v1430, %v1431
      %v1433 = vshll.u32 2131351028, %v1424
      %v1434 = vshrl.u32 2102212464, %v1425
      %v1435 = vor.u32 %v1433, %v1434
      %v1436 = vshll.u32 2102212464, %v1424
      %v1437 = vshrl.u32 920167782, %v1425
      %v1438 = vor.u32 %v1436, %v1437
      %v1439 = vshll.u32 920167782, %v1424
      %v1440 = vshrl.u32 1326507024, %v1425
      %v1441 = vor.u32 %v1439, %v1440
      %vm1442 = vcmp.lt.s32.totalorder %v1423, 1
      %vm1443 = vcmp.lt.s32.totalorder %v1423, 2
      %vm1444 = vcmp.lt.s32.totalorder %v1423, 3
      %vm1445 = vcmp.lt.s32.totalorder %v1423, 4
      %v1446 = vsel %vm1442, %v1426, %v1429
      %v1447 = vsel %vm1445, %v1435, 2102212464
      %v1448 = vsel %vm1444, %v1432, %v1447
      %v1449 = vsel %vm1443, %v1446, %v1448
      %v1450 = vsel %vm1442, %v1429, %v1432
      %v1451 = vsel %vm1445, %v1438, 920167782
      %v1452 = vsel %vm1444, %v1435, %v1451
      %v1453 = vsel %vm1443, %v1450, %v1452
      %v1454 = vsel %vm1442, %v1432, %v1435
      %v1455 = vsel %vm1445, %v1441, 1326507024
      %v1456 = vsel %vm1444, %v1438, %v1455
      %v1457 = vsel %vm1443, %v1454, %v1456
      %v1458 = vshll.u32 %v1418, 8
      %v1459 = vand.u32 %v1458, 65535
      %v1460 = vshrl.u32 %v1458, 16
      %v1461 = vand.u32 %v1457, 65535
      %v1462 = vshrl.u32 %v1457, 16
      %v1463 = vmul.u32 %v1459, %v1461
      %v1464 = vmul.u32 %v1459, %v1462
      %v1465 = vmul.u32 %v1460, %v1461
      %v1466 = vmul.u32 %v1460, %v1462
      %v1467 = vshll.u32 %v1464, 16
      %v1468 = vshrl.u32 %v1464, 16
      %v1469 = vshll.u32 %v1465, 16
      %v1470 = vshrl.u32 %v1465, 16
      %vm1471 = vc.u32 %v1463, %v1467
      %v1472 = vsel %vm1471, 1, 0
      %v1473 = vadd.s32 %v1463, %v1467
      %v1474 = vadd.s32 %v1466, %v1472
      %vm1475 = vc.u32 %v1473, %v1469
      %v1476 = vsel %vm1475, 1, 0
      %v1477 = vadd.s32 %v1473, %v1469
      %v1478 = vadd.s32 %v1474, %v1476
      %v1479 = vadd.s32 %v1478, %v1468
      %v1480 = vadd.s32 %v1479, %v1470
      %v1481 = vand.u32 %v1458, 65535
      %v1482 = vshrl.u32 %v1458, 16
      %v1483 = vand.u32 %v1453, 65535
      %v1484 = vshrl.u32 %v1453, 16
      %v1485 = vmul.u32 %v1481, %v1483
      %v1486 = vmul.u32 %v1481, %v1484
      %v1487 = vmul.u32 %v1482, %v1483
      %v1488 = vmul.u32 %v1482, %v1484
      %v1489 = vshll.u32 %v1486, 16
      %v1490 = vshrl.u32 %v1486, 16
      %v1491 = vshll.u32 %v1487, 16
      %v1492 = vshrl.u32 %v1487, 16
      %vm1493 = vc.u32 %v1485, %v1489
      %v1494 = vsel %vm1493, 1, 0
      %v1495 = vadd.s32 %v1485, %v1489
      %v1496 = vadd.s32 %v1488, %v1494
      %vm1497 = vc.u32 %v1495, %v1491
      %v1498 = vsel %vm1497, 1, 0
      %v1499 = vadd.s32 %v1495, %v1491
      %v1500 = vadd.s32 %v1496, %v1498
      %v1501 = vadd.s32 %v1500, %v1490
      %v1502 = vadd.s32 %v1501, %v1492
      %v1503 = vmul.u32 %v1458, %v1449
      %v1504 = vadd.s32 %v1480, %v1499
      %vm1505 = vc.u32 %v1480, %v1499
      %v1506 = vadd.s32 %v1502, 1
      %v1507 = vsel %vm1505, %v1506, %v1502
      %v1508 = vadd.s32 %v1503, %v1507
      %v1509 = vadd.s32 %v1508, 536870912
      %v1510 = vshrl.u32 %v1509, 30
      %v1511 = vshll.u32 %v1510, 30
      %v1512 = vsub.s32 %v1508, %v1511
      %vm1513 = vcmp.lt.s32.totalorder %v1512, 0
      %v1514 = vsub.s32 0, %v1512
      %v1515 = vsel %vm1513, %v1514, %v1512
      %v1516 = vclz %v1515
      %v1517 = vsub.s32 %v1516, 2
      %vm1518 = vcmp.gt.s32.totalorder 0, %v1517
      %v1519 = vsel %vm1518, 0, %v1517
      %v1520 = vsub.s32 32, %v1519
      %v1521 = vshll.u32 %v1512, %v1519
      %v1522 = vshrl.u32 %v1504, %v1520
      %v1523 = vor.u32 %v1521, %v1522
      %v1524 = vsub.s32 4294967266, %v1519
      %v1525 = vadd.s32 %v1524, 127
      %v1526 = vshll.u32 %v1525, 23
      %v1527 = vor.u32 4788187, %v1526
      %v1528 = vand.u32 2147483647, %v1527
      %v1530 = vcvt.s32.f32 %v1523
      %v1531 = vmul.f32 %v1530, %v1528
      %v1532 = vxor.u32 %v1531, 2147483648
      %v1533 = vsel %vm1412, %v1532, %v1531
      %v1534 = vsub.s32 4, %v1510
      %v1535 = vsel %vm1412, %v1534, %v1510
      %v1536 = vsel %vm1411, %v327, %v1533
      %v1537 = vsel %vm1411, 0, %v1535
      %v1538 = vmul.f32 %v1536, %v1536
      %v1539 = vmul.f32 %v1538, -0.001358992
      %v1540 = vadd.f32 %v1539, 0.041655596
      %v1541 = vmul.f32 %v1538, %v1540
      %v1542 = vadd.f32 %v1541, -0.4999988
      %v1543 = vmul.f32 %v1538, %v1542
      %v1544 = vadd.f32 1.0, %v1543
      %v1545 = vmul.f32 %v1536, %v1536
      %v1546 = vmul.f32 %v1545, -0.00019511016
      %v1547 = vadd.f32 %v1546, 0.008332121
      %v1548 = vmul.f32 %v1545, %v1547
      %v1549 = vadd.f32 %v1548, -0.16666654
      %v1550 = vmul.f32 %v1545, %v1549
      %v1551 = vadd.f32 %v1550, 1.0
      %v1552 = vmul.f32 %v1551, %v1536
      %vm1553 = vweird.f32 %v327
      %v1554 = vand.u32 %v1537, 3
      %vm1555 = vcmp.lt.s32.totalorder %v1554, 2
      %vm1556 = vcmp.eq.s32.totalorder %v1554, 0
      %v1557 = vxor.u32 %v1552, 2147483648
      %v1558 = vsel %vm1556, %v1544, %v1557
      %vm1559 = vcmp.eq.s32.totalorder %v1554, 2
      %v1560 = vxor.u32 %v1544, 2147483648
      %v1561 = vsel %vm1559, %v1560, %v1552
      %v1562 = vsel %vm1555, %v1558, %v1561
      %v1563 = vsel %vm1553, nan, %v1562
      %v1564 = vld [vmem:[%s278] sm:$0x1]
      %v1565 = vld [vmem:[%s282] sm:$0xf]
      %vm1566 = vcmask 31744
      %v1568 = vsel %vm1566, %v482, 0
      %v1571 = vsel %vm1566, %v637, 0
      %v1574 = vsel %vm1566, %v792, 0
      %v1577 = vsel %vm1566, %v947, 0
      %vm1579 = vcmask 1043456
      %v1581 = vsel %vm1579, %v1565, 0
      %1583 = vmatpush.msra.mxu0 0.0
      %1584 = vmatpush.msra.mxu0 0.0
      %1585 = vmatpush.msra.mxu0 0.0
      %1586 = vmatpush.msra.mxu0 0.0
      %1587 = vmatpush.msra.mxu0 0.0
      %1588 = vmatpush.msra.mxu0 0.0
      %1589 = vmatpush.msra.mxu0 0.0
      %1590 = vmatpush.msra.mxu0 0.0
      %1591 = vmatpush.msra.mxu0 0.0
      %1592 = vmatpush.msra.mxu0 0.0
      %1593 = vmatpush.msra.mxu0 0.0
      %1594 = vmatpush.msra.mxu0 0.0
      %1595 = vmatpush.msra.mxu0 0.0
      %1596 = vmatpush.msra.mxu0 0.0
      %1597 = vmatpush.msra.mxu0 0.0
      %1598 = vmatpush.msra.mxu0 %v1581
      %1599 = vmatmul.f32.gmra.mxu0 %v1568
      %v1600 = vpop.f32.mrf.mxu0
      %v1601 = vadd.f32 0.0, %v1600
      %1602 = vmatmul.f32.gmra.mxu0 %v1571
      %v1603 = vpop.f32.mrf.mxu0
      %v1604 = vadd.f32 0.0, %v1603
      %1605 = vmatmul.f32.gmra.mxu0 %v1574
      %v1606 = vpop.f32.mrf.mxu0
      %v1607 = vadd.f32 0.0, %v1606
      %1608 = vmatmul.f32.gmra.mxu0 %v1577
      %v1609 = vpop.f32.mrf.mxu0
      %v1610 = vadd.f32 0.0, %v1609
      %1611 = vdwg.mxu0
      %v1613 = vperm.slane %v1564, 0
      %v1615 = vadd.f32 %v1613, %v1601
      %v1616 = vadd.f32 %v1613, %v1604
      %v1617 = vadd.f32 %v1613, %v1607
      %v1618 = vadd.f32 %v1613, %v1610
      %v1619 = vld [vmem:[%s286] sm:$0xf]
      %v1621 = vsel %vm1566, %v1101, 0
      %v1624 = vsel %vm1566, %v1255, 0
      %v1627 = vsel %vm1566, %v1409, 0
      %v1630 = vsel %vm1566, %v1563, 0
      %v1633 = vsel %vm1579, %v1619, 0
      %1635 = vmatpush.msra.mxu0 0.0
      %1636 = vmatpush.msra.mxu0 0.0
      %1637 = vmatpush.msra.mxu0 0.0
      %1638 = vmatpush.msra.mxu0 0.0
      %1639 = vmatpush.msra.mxu0 0.0
      %1640 = vmatpush.msra.mxu0 0.0
      %1641 = vmatpush.msra.mxu0 0.0
      %1642 = vmatpush.msra.mxu0 0.0
      %1643 = vmatpush.msra.mxu0 0.0
      %1644 = vmatpush.msra.mxu0 0.0
      %1645 = vmatpush.msra.mxu0 0.0
      %1646 = vmatpush.msra.mxu0 0.0
      %1647 = vmatpush.msra.mxu0 0.0
      %1648 = vmatpush.msra.mxu0 0.0
      %1649 = vmatpush.msra.mxu0 0.0
      %1650 = vmatpush.msra.mxu0 %v1633
      %1651 = vmatmul.f32.gmra.mxu0 %v1621
      %v1652 = vpop.f32.mrf.mxu0
      %v1653 = vadd.f32 0.0, %v1652
      %1654 = vmatmul.f32.gmra.mxu0 %v1624
      %v1655 = vpop.f32.mrf.mxu0
      %v1656 = vadd.f32 0.0, %v1655
      %1657 = vmatmul.f32.gmra.mxu0 %v1627
      %v1658 = vpop.f32.mrf.mxu0
      %v1659 = vadd.f32 0.0, %v1658
      %1660 = vmatmul.f32.gmra.mxu0 %v1630
      %v1661 = vpop.f32.mrf.mxu0
      %v1662 = vadd.f32 0.0, %v1661
      %1663 = vdwg.mxu0
      %v1664 = vadd.f32 %v1615, %v1653
      %v1665 = vadd.f32 %v1616, %v1656
      %v1666 = vadd.f32 %v1617, %v1659
      %v1667 = vadd.f32 %v1618, %v1662
      %vm1668 = vcmask 23552
      %1669 = vst.msk [vmem:[%s294] sm:$0xff] %vm1668, %v1664
      %1670 = vst.msk [vmem:[%s294 + $0x8] sm:$0xff] %vm1668, %v1665
      %1671 = vst.msk [vmem:[%s294 + $0x10] sm:$0xff] %vm1668, %v1666
      %1672 = vst.msk [vmem:[%s294 + $0x18] sm:$0xff] %vm1668, %v1667
      %s1673 = smul.u32 4, %s20
      %p1674 = scmp.lt.s32.totalorder %s1673, 7
      %s1675 = scalar_select %p1674, %s1673, 7
      %p1676 = scmp.lt.s32.totalorder %s21, 0
      %s1677 = scalar_select %p1676, %s21, 0
      %s1678 = sadd.s32 %s1677, %s1675
      %s1679 = smul.addr %s1678, 8
      %s1680 = scalar_lea.vmem %s5, %s1679
      // Predicated region
      $region41: #{tpu_custom_call.1} parent=39 // pred_check
        %p1681 = pneg %p173
      $region42: #{tpu_custom_call.1} parent=39 // pred_check_branch
        %1683 = sbr.rel (%p1681) target = $region44
      $region43: #{tpu_custom_call.1} parent=39 // pred_region
        %s1684 = smul.u32 4, %s20
      $region44: #{tpu_custom_call.1} parent=39 // pred_fallthru
        _
    $region40: #{tpu_custom_call.1} parent=5 // pred_fallthru
      _
    %p1685 = scmp.le.s32.totalorder 2, %s11
    // Predicated region
    $region45: #{tpu_custom_call.1} parent=5 // pred_check
      %p1686 = pneg %p1685
    $region46: #{tpu_custom_call.1} parent=5 // pred_check_branch
      %1688 = sbr.rel (%p1686) target = $region48
    $region47: #{tpu_custom_call.1} parent=5 // pred_region
      %s1689 = ssub.s32 %s11, 2
      // Predicated region
      $region49: #{tpu_custom_call.1} parent=47 // pred_check
        %p1690 = pneg %p179
      $region50: #{tpu_custom_call.1} parent=47 // pred_check_branch
        %1692 = sbr.rel (%p1690) target = $region52
      $region51: #{tpu_custom_call.1} parent=47 // pred_region
        %s1693 = smul.u32 4, %s22
        %p1694 = scmp.lt.s32.totalorder %s1693, 7
        %s1695 = scalar_select %p1694, %s1693, 7
        %p1696 = scmp.lt.s32.totalorder %s23, 0
        %s1697 = scalar_select %p1696, %s23, 0
        %s1698 = sadd.s32 %s1697, %s1695
        %s1699 = smul.addr %s1698, 8
        %s1700 = scalar_lea.vmem %s5, %s1699
      $region52: #{tpu_custom_call.1} parent=47 // pred_fallthru
        _
    $region48: #{tpu_custom_call.1} parent=5 // pred_fallthru
      _
  $region6: #{tpu_custom_call.1} parent=0 // loop_footer
    %s15 = sadd.s32 1, %s11
  $region7: #{tpu_custom_call.1} parent=0 // loop_footer_branch
    %10 = sbr.rel target = $region3
  $region8: #{tpu_custom_call.1} parent=0 // loop_exit
    _

</llo_original>
